<compile_context>
chip_gen: v7x
topology: tpu7x:2x2x1
jax: 0.10.0
libtpu: 0.0.40
codegen_flags: <defaults>
</compile_context>

<pallas_src>
import jax
import jax.numpy as jnp
from jax.experimental import pallas as pl
from jax.experimental.pallas import tpu as pltpu

IN_FEATURES = 28 * 28          # 784
IN_PAD = 896                   # 7 * 128, lane-aligned K for matmul 1
HIDDEN = 512
NUM_CLASSES = 10
PAD_CLASSES = 128              # lane-dense output width
NEG_INF = -1e30                # pad-lane logit mask, baked into b3


# ----------------------------------------------------------------------------
# Fused kernel: 3 matmuls + ReLU + softmax (pad-lane mask lives in b3)
# ----------------------------------------------------------------------------
def _mlp_kernel(x_ref, w1_ref, b1_ref, w2_ref, b2_ref, w3_ref, b3_ref, out_ref):
    # MLP: bf16 MXU inputs, f32 accumulation, f32 elementwise math.
    xb = x_ref[...].astype(jnp.bfloat16)                 # (TB, 896)
    h1 = jnp.dot(xb, w1_ref[...], preferred_element_type=jnp.float32)
    h1 = jnp.maximum(h1 + b1_ref[...], 0.0)              # (TB, 512) f32

    h2 = jnp.dot(h1.astype(jnp.bfloat16), w2_ref[...],
                 preferred_element_type=jnp.float32)
    h2 = jnp.maximum(h2 + b2_ref[...], 0.0)              # (TB, 512) f32

    logits = jnp.dot(h2.astype(jnp.bfloat16), w3_ref[...],
                     preferred_element_type=jnp.float32)
    # b3 carries -1e30 in pad lanes (>= NUM_CLASSES) -> zero softmax mass,
    # no per-step iota/compare/select needed.
    logits = logits + b3_ref[...]                        # (TB, 128) f32

    # Numerically-stable softmax over dim=1; divide via EUP approx reciprocal.
    m = jnp.max(logits, axis=1, keepdims=True)
    e = jnp.exp(logits - m)
    s = jnp.sum(e, axis=1, keepdims=True)
    out_ref[...] = e * pl.reciprocal(s, approx=True)


# ----------------------------------------------------------------------------
# Wrapper: batch grid, weight-resident specs, pad/slice of batch, K and classes
# ----------------------------------------------------------------------------
def mlp_forward(x_flat, params, *, tb=256):
    B, D = x_flat.shape
    assert D == IN_FEATURES
    w1, b1, w2, b2, w3, b3 = params

    # Clamp TB so the batch grid has >= 2 steps (v7x dual-TC sharding) and is
    # a multiple of 8 (f32 sublane tile). TB<=256 keeps VMEM/spill modest on
    # all generations (v5e MXU already saturated at M=128).
    tb = min(tb, max(8, pl.cdiv(B, 2)))
    tb = pl.cdiv(tb, 8) * 8
    b_pad = pl.cdiv(B, tb) * tb
    grid = (b_pad // tb,)

    # Zero-pad batch rows and feature columns (784 -> 896) in one pad.
    x_flat = jnp.pad(x_flat, ((0, b_pad - B), (0, IN_PAD - D)))

    flops = 2 * b_pad * (IN_PAD * HIDDEN + HIDDEN * HIDDEN
                         + HIDDEN * PAD_CLASSES)
    bytes_accessed = (b_pad * IN_PAD * 4                     # x (f32)
                      + (w1.size + w2.size + w3.size) * 2    # bf16 weights
                      + (b1.size + b2.size + b3.size) * 4    # f32 biases
                      + b_pad * PAD_CLASSES * 4)             # output

    out = pl.pallas_call(
        _mlp_kernel,
        out_shape=jax.ShapeDtypeStruct((b_pad, PAD_CLASSES), jnp.float32),
        grid=grid,
        in_specs=[
            pl.BlockSpec((tb, IN_PAD), lambda i: (i, 0)),    # x tile (pipelined)
            pl.BlockSpec(w1.shape, lambda i: (0, 0)),        # weights resident
            pl.BlockSpec(b1.shape, lambda i: (0, 0)),
            pl.BlockSpec(w2.shape, lambda i: (0, 0)),
            pl.BlockSpec(b2.shape, lambda i: (0, 0)),
            pl.BlockSpec(w3.shape, lambda i: (0, 0)),
            pl.BlockSpec(b3.shape, lambda i: (0, 0)),
        ],
        out_specs=pl.BlockSpec((tb, PAD_CLASSES), lambda i: (i, 0)),
        compiler_params=pltpu.CompilerParams(
            dimension_semantics=("parallel",),
            vmem_limit_bytes=32 * 1024 * 1024),
        cost_estimate=pl.CostEstimate(
            flops=flops,
            transcendentals=b_pad * PAD_CLASSES,
            bytes_accessed=bytes_accessed),
    )(x_flat, w1, b1, w2, b2, w3, b3)

    # Drop batch padding and pad lanes -> (B, 10) probabilities.
    return out[:B, :NUM_CLASSES]


def neural_network_forward(x, params):
    # nn.Flatten: (B, 28, 28) -> (B, 784).
    x_flat = x.reshape(x.shape[0], -1)
    return mlp_forward(x_flat, params)


# ----------------------------------------------------------------------------
# Parameter init (PyTorch nn.Linear-style uniform), stored (in, out).
# Weights bf16 for the MXU, biases (1, out) in f32.
#  - w1 rows zero-padded 784 -> 896 (K alignment).
#  - Layer 3 padded 10 -> 128 lanes: w3 pad columns are zero, b3 pad lanes are
#    -1e30 (f32, never cast to bf16) so pad logits get zero softmax mass.
# ----------------------------------------------------------------------------
def init_params(key):
    ks = jax.random.split(key, 6)

    def lin(kw, kb, fan_in, fan_out, pad_in=None, pad_out=None, bias_pad_val=0.0):
        bound = 1.0 / jnp.sqrt(float(fan_in))
        w = jax.random.uniform(kw, (fan_in, fan_out), jnp.float32, -bound, bound)
        b = jax.random.uniform(kb, (1, fan_out), jnp.float32, -bound, bound)
        if pad_in is not None and pad_in > fan_in:
            w = jnp.pad(w, ((0, pad_in - fan_in), (0, 0)))
        if pad_out is not None and pad_out > fan_out:
            w = jnp.pad(w, ((0, 0), (0, pad_out - fan_out)))
            b = jnp.pad(b, ((0, 0), (0, pad_out - fan_out)),
                        constant_values=bias_pad_val)
        return w.astype(jnp.bfloat16), b.astype(jnp.float32)

    w1, b1 = lin(ks[0], ks[1], IN_FEATURES, HIDDEN, pad_in=IN_PAD)
    w2, b2 = lin(ks[2], ks[3], HIDDEN, HIDDEN)
    w3, b3 = lin(ks[4], ks[5], HIDDEN, NUM_CLASSES,
                 pad_out=PAD_CLASSES, bias_pad_val=NEG_INF)
    return (w1, b1, w2, b2, w3, b3)


if __name__ == "__main__":
    key = jax.random.PRNGKey(0)
    k_x, k_p = jax.random.split(key)

    # Small batch consistent with the module's (N, 28, 28) input; large enough
    # that the clamped batch grid has 2 steps (exercises the pipeline / both
    # TCs on v7x).
    B = 32
    x = jax.random.uniform(k_x, (B, 28, 28), jnp.float32)
    params = init_params(k_p)

    prob = neural_network_forward(x, params)
    prob = jax.block_until_ready(prob)

    # Sanity: shape, softmax rows sum to 1 (approx reciprocal tolerance),
    # non-negative probabilities.
    assert prob.shape == (B, NUM_CLASSES)
    row_sums = jnp.sum(prob, axis=1)
    assert bool(jnp.all(jnp.abs(row_sums - 1.0) < 5e-3))
    assert bool(jnp.all(prob >= 0.0))

    print("KERNEL_OK")
</pallas_src>

<mosaic_0001>
module attributes {stable_mosaic.version = 11 : i64} {
  func.func @_mlp_kernel(%arg0: i32, %arg1: memref<16x896xf32, #tpu.memory_space<vmem>>, %arg2: memref<896x512xbf16, #tpu.memory_space<vmem>>, %arg3: memref<1x512xf32, #tpu.memory_space<vmem>>, %arg4: memref<512x512xbf16, #tpu.memory_space<vmem>>, %arg5: memref<1x512xf32, #tpu.memory_space<vmem>>, %arg6: memref<512x128xbf16, #tpu.memory_space<vmem>>, %arg7: memref<1x128xf32, #tpu.memory_space<vmem>>, %arg8: memref<16x128xf32, #tpu.memory_space<vmem>>) attributes {dimension_semantics = [#tpu.dimension_semantics<parallel>], iteration_bounds = array<i64: 2>, scalar_prefetch = 0 : i64, scratch_operands = 0 : i64, tpu.core_type = #tpu.core_type<tc>, window_params = [{transform_indices = @transform_0, window_bounds = array<i64: 16, 896>}, {pipeline_mode = #tpu.pipeline_mode<synchronous>, transform_indices = @transform_1, window_bounds = array<i64: 896, 512>}, {pipeline_mode = #tpu.pipeline_mode<synchronous>, transform_indices = @transform_2, window_bounds = array<i64: 1, 512>}, {pipeline_mode = #tpu.pipeline_mode<synchronous>, transform_indices = @transform_3, window_bounds = array<i64: 512, 512>}, {pipeline_mode = #tpu.pipeline_mode<synchronous>, transform_indices = @transform_4, window_bounds = array<i64: 1, 512>}, {pipeline_mode = #tpu.pipeline_mode<synchronous>, transform_indices = @transform_5, window_bounds = array<i64: 512, 128>}, {pipeline_mode = #tpu.pipeline_mode<synchronous>, transform_indices = @transform_6, window_bounds = array<i64: 1, 128>}, {transform_indices = @transform_7, window_bounds = array<i64: 16, 128>}]} {
    %c0 = arith.constant 0 : index
    %c0_0 = arith.constant 0 : index
    %0 = vector.load %arg1[%c0, %c0_0] : memref<16x896xf32, #tpu.memory_space<vmem>>, vector<16x896xf32>
    %1 = arith.truncf %0 : vector<16x896xf32> to vector<16x896xbf16>
    %c0_1 = arith.constant 0 : index
    %c0_2 = arith.constant 0 : index
    %2 = vector.load %arg2[%c0_1, %c0_2] : memref<896x512xbf16, #tpu.memory_space<vmem>>, vector<896x512xbf16>
    %cst = arith.constant dense<0.000000e+00> : vector<16x512xf32>
    %3 = tpu.matmul %1, %2, %cst {dimension_numbers = #tpu.dot_dimension_numbers<[1], [0], [0], [1], [0, 0, 1, 1], [], []>} : vector<16x896xbf16>, vector<896x512xbf16>, vector<16x512xf32> -> vector<16x512xf32>
    %c0_3 = arith.constant 0 : index
    %c0_4 = arith.constant 0 : index
    %4 = vector.load %arg3[%c0_3, %c0_4] : memref<1x512xf32, #tpu.memory_space<vmem>>, vector<1x512xf32>
    %5 = vector.broadcast %4 : vector<1x512xf32> to vector<16x512xf32>
    %6 = arith.addf %3, %5 : vector<16x512xf32>
    %cst_5 = arith.constant 0.000000e+00 : f32
    %7 = vector.broadcast %cst_5 : f32 to vector<16x512xf32>
    %8 = arith.maximumf %6, %7 : vector<16x512xf32>
    %9 = arith.truncf %8 : vector<16x512xf32> to vector<16x512xbf16>
    %c0_6 = arith.constant 0 : index
    %c0_7 = arith.constant 0 : index
    %10 = vector.load %arg4[%c0_6, %c0_7] : memref<512x512xbf16, #tpu.memory_space<vmem>>, vector<512x512xbf16>
    %cst_8 = arith.constant dense<0.000000e+00> : vector<16x512xf32>
    %11 = tpu.matmul %9, %10, %cst_8 {dimension_numbers = #tpu.dot_dimension_numbers<[1], [0], [0], [1], [0, 0, 1, 1], [], []>} : vector<16x512xbf16>, vector<512x512xbf16>, vector<16x512xf32> -> vector<16x512xf32>
    %c0_9 = arith.constant 0 : index
    %c0_10 = arith.constant 0 : index
    %12 = vector.load %arg5[%c0_9, %c0_10] : memref<1x512xf32, #tpu.memory_space<vmem>>, vector<1x512xf32>
    %13 = vector.broadcast %12 : vector<1x512xf32> to vector<16x512xf32>
    %14 = arith.addf %11, %13 : vector<16x512xf32>
    %cst_11 = arith.constant 0.000000e+00 : f32
    %15 = vector.broadcast %cst_11 : f32 to vector<16x512xf32>
    %16 = arith.maximumf %14, %15 : vector<16x512xf32>
    %17 = arith.truncf %16 : vector<16x512xf32> to vector<16x512xbf16>
    %c0_12 = arith.constant 0 : index
    %c0_13 = arith.constant 0 : index
    %18 = vector.load %arg6[%c0_12, %c0_13] : memref<512x128xbf16, #tpu.memory_space<vmem>>, vector<512x128xbf16>
    %cst_14 = arith.constant dense<0.000000e+00> : vector<16x128xf32>
    %19 = tpu.matmul %17, %18, %cst_14 {dimension_numbers = #tpu.dot_dimension_numbers<[1], [0], [0], [1], [0, 0, 1, 1], [], []>} : vector<16x512xbf16>, vector<512x128xbf16>, vector<16x128xf32> -> vector<16x128xf32>
    %c0_15 = arith.constant 0 : index
    %c0_16 = arith.constant 0 : index
    %20 = vector.load %arg7[%c0_15, %c0_16] : memref<1x128xf32, #tpu.memory_space<vmem>>, vector<1x128xf32>
    %21 = vector.broadcast %20 : vector<1x128xf32> to vector<16x128xf32>
    %22 = arith.addf %19, %21 : vector<16x128xf32>
    %cst_17 = arith.constant dense<0xFF800000> : vector<16xf32>
    %23 = vector.multi_reduction <maximumf>, %22, %cst_17 [1] : vector<16x128xf32> to vector<16xf32>
    %24 = vector.shape_cast %23 : vector<16xf32> to vector<16x1xf32>
    %25 = vector.broadcast %24 : vector<16x1xf32> to vector<16x128xf32>
    %26 = arith.subf %22, %25 : vector<16x128xf32>
    %27 = math.exp %26 : vector<16x128xf32>
    %cst_18 = arith.constant dense<0.000000e+00> : vector<16xf32>
    %28 = vector.multi_reduction <add>, %27, %cst_18 [1] : vector<16x128xf32> to vector<16xf32>
    %29 = vector.shape_cast %28 : vector<16xf32> to vector<16x1xf32>
    %30 = tpu.reciprocal %29 {approx = true} : vector<16x1xf32> -> vector<16x1xf32>
    %31 = vector.broadcast %30 : vector<16x1xf32> to vector<16x128xf32>
    %32 = arith.mulf %27, %31 : vector<16x128xf32>
    %c0_19 = arith.constant 0 : index
    %c0_20 = arith.constant 0 : index
    %33 = vector.load %arg8[%c0_19, %c0_20] : memref<16x128xf32, #tpu.memory_space<vmem>>, vector<16x128xf32>
    tpu.vector_store %arg8[%c0_19, %c0_20], %32 {strides = array<i32>} : memref<16x128xf32, #tpu.memory_space<vmem>>, vector<16x128xf32>,
    return
  }
  func.func @transform_0(%arg0: i32) -> (i32, i32) {
    %c0_i32 = arith.constant 0 : i32
    %c0_i32_0 = arith.constant 0 : i32
    return %arg0, %c0_i32 : i32, i32
  }
  func.func @transform_1(%arg0: i32) -> (i32, i32) {
    %c0_i32 = arith.constant 0 : i32
    %c0_i32_0 = arith.constant 0 : i32
    %c0_i32_1 = arith.constant 0 : i32
    return %c0_i32, %c0_i32_0 : i32, i32
  }
  func.func @transform_2(%arg0: i32) -> (i32, i32) {
    %c0_i32 = arith.constant 0 : i32
    %c0_i32_0 = arith.constant 0 : i32
    %c0_i32_1 = arith.constant 0 : i32
    return %c0_i32, %c0_i32_0 : i32, i32
  }
  func.func @transform_3(%arg0: i32) -> (i32, i32) {
    %c0_i32 = arith.constant 0 : i32
    %c0_i32_0 = arith.constant 0 : i32
    %c0_i32_1 = arith.constant 0 : i32
    return %c0_i32, %c0_i32_0 : i32, i32
  }
  func.func @transform_4(%arg0: i32) -> (i32, i32) {
    %c0_i32 = arith.constant 0 : i32
    %c0_i32_0 = arith.constant 0 : i32
    %c0_i32_1 = arith.constant 0 : i32
    return %c0_i32, %c0_i32_0 : i32, i32
  }
  func.func @transform_5(%arg0: i32) -> (i32, i32) {
    %c0_i32 = arith.constant 0 : i32
    %c0_i32_0 = arith.constant 0 : i32
    %c0_i32_1 = arith.constant 0 : i32
    return %c0_i32, %c0_i32_0 : i32, i32
  }
  func.func @transform_6(%arg0: i32) -> (i32, i32) {
    %c0_i32 = arith.constant 0 : i32
    %c0_i32_0 = arith.constant 0 : i32
    %c0_i32_1 = arith.constant 0 : i32
    return %c0_i32, %c0_i32_0 : i32, i32
  }
  func.func @transform_7(%arg0: i32) -> (i32, i32) {
    %c0_i32 = arith.constant 0 : i32
    %c0_i32_0 = arith.constant 0 : i32
    return %arg0, %c0_i32 : i32, i32
  }
}

</mosaic_0001>

<llo_original>
// kernel: tpu_custom_call.1
$region0: #{tpu_custom_call.1}
  #allocation0 [shape = 'u32[]', space=smem, size = 0x4, offset = 0x4, fixed_abs, tag = 'smem constant byte address 0x4 - core index']
  #allocation1 [shape = 'u32[144,128]{1,0:T(1,128)}', space=vmem, size = 0x12000, scoped, tag = 'internal scratch']
  %s0 = inlined_call_operand.hbm [shape: f32[32,896], index: 0, kind: input, shape index: {}]
  %s1 = inlined_call_operand.hbm [shape: bf16[896,512], index: 1, kind: input, shape index: {}]
  %s2 = inlined_call_operand.vmem [shape: f32[1,512], index: 2, kind: input, shape index: {}]
  %s3 = inlined_call_operand.hbm [shape: bf16[512,512], index: 3, kind: input, shape index: {}]
  %s4 = inlined_call_operand.vmem [shape: f32[1,512], index: 4, kind: input, shape index: {}]
  %s5 = inlined_call_operand.hbm [shape: bf16[512,128], index: 5, kind: input, shape index: {}]
  %s6 = inlined_call_operand.vmem [shape: f32[1,128], index: 6, kind: input, shape index: {}]
  %s7 = inlined_call_operand.hbm [shape: f32[32,128], index: 7, kind: output, shape index: {}]
  %s8 = sld [smem:[#allocation0]]
  $region77: #{tpu_custom_call.1} parent=0
    _
  %s10 = ssub.s32 1, %s8
  %s11 = scalar_select 0, %s10, %s8
  $region1: #{tpu_custom_call.1} parent=0
    #allocation2 [shape = 'u8[114688]{0}', space=vmem, size = 0x1c000, scoped, tag = 'input window, operand 0']
    #allocation3 [shape = 's32[2]{0}', space=sflag, size = 0x8, scoped, tag = 'scoped memory for tpu_custom_call.1']
    #allocation4 [shape = 's32[2]{0}', space=sflag, size = 0x8, scoped, tag = 'scoped memory for tpu_custom_call.1']
    #allocation5 [shape = 'u8[917504]{0}', space=vmem, size = 0xe0000, scoped, tag = 'input window, operand 1, single buffered']
    #allocation6 [shape = 's32[1]{0}', space=sflag, size = 0x4, scoped, tag = 'scoped memory for tpu_custom_call.1']
    #allocation7 [shape = 'u8[524288]{0}', space=vmem, size = 0x80000, scoped, tag = 'input window, operand 3, single buffered']
    #allocation8 [shape = 'u8[131072]{0}', space=vmem, size = 0x20000, scoped, tag = 'input window, operand 5, single buffered']
    #allocation9 [shape = 's32[1]{0}', space=sflag, size = 0x4, scoped, tag = 'scoped memory for tpu_custom_call.1']
    #allocation10 [shape = 'u8[16384]{0}', space=vmem, size = 0x4000, scoped, tag = 'output window, operand 0']
    %12 = vsyncpa [#allocation3], 0
    %s13 = scalar_lea.sflag [#allocation3], 1
    %14 = vsyncpa %s13, 0
    %15 = vsyncpa [#allocation6], 0
    %16 = vsyncpa [#allocation9], 0
    %17 = vsyncpa [#allocation4], 0
    %s18 = scalar_lea.sflag [#allocation4], 1
    %19 = vsyncpa %s18, 0
    loop: start=0, step=1, limit=4
    $region2: #{tpu_custom_call.1} parent=1 // loop_pre_header
      _
    $region3: #{tpu_custom_call.1} parent=1 // loop_header
      %s21 = sphi 0, %s25
      %p22 = scmp.ge.s32.totalorder %s21, 4
      %s31 = sphi 0, %s33
      %s34 = sphi 0, %s31
      %s35 = sphi 0, %s34
      %s51 = sphi 0, %s35
      %s55 = sphi 0, %s55
      %s57 = sphi 0, %s55
      %s58 = sphi 0, %s57
      %s72 = sphi 0, %s58
      %s76 = sphi 0, %s76
      %s78 = sphi 0, %s76
      %s79 = sphi 0, %s78
      %s93 = sphi 0, %s79
      %s97 = sphi 0, %s97
      %s99 = sphi 0, %s97
      %s100 = sphi 0, %s99
      %s114 = sphi 0, %s100
      %s118 = sphi 0, %s118
      %s120 = sphi 0, %s118
      %s121 = sphi 0, %s120
      %s135 = sphi 0, %s121
      %s139 = sphi 0, %s139
      %s141 = sphi 0, %s139
      %s142 = sphi 0, %s141
      %s156 = sphi 0, %s142
      %s160 = sphi 0, %s160
      %s162 = sphi 0, %s160
      %s163 = sphi 0, %s162
      %s177 = sphi 0, %s163
      %s183 = sphi 0, %s185
      %s186 = sphi 0, %s183
      %s187 = sphi 0, %s186
      %s203 = sphi 0, %s187
    $region4: #{tpu_custom_call.1} parent=1 // loop_header_branch
      %24 = sbr.rel (%p22) target = $region8
    $region5: #{tpu_custom_call.1} parent=1 // loop_body
      %s26 = ssub.s32 %s21, 1
      %s27 = ssub.s32 %s21, 2
      %s28 = sadd.s32 %s21, 1
      %s29 = ssub.s32 %s21, %s28
      %p30 = scmp.eq.s32.totalorder %s29, 0
      %s32 = sadd.s32 %s31, 1
      %s33 = scalar_select %p30, %s31, %s32
      %p36 = pneg %p30
      %p37 = scmp.eq.s32.totalorder %s21, 1
      %p38 = por %p36, %p37
      %p39 = scmp.ne.s32.totalorder %s31, %s34
      %p40 = scmp.eq.s32.totalorder %s21, 0
      %p41 = por %p39, %p40
      %p42 = scmp.ne.s32.totalorder %s31, %s34
      %p43 = scmp.eq.s32.totalorder %s26, 1
      %p44 = por %p42, %p43
      %p45 = scmp.ne.s32.totalorder %s34, %s35
      %p46 = scmp.eq.s32.totalorder %s26, 0
      %p47 = por %p45, %p46
      %p48 = scmp.ne.s32.totalorder %s34, %s35
      %p49 = scmp.eq.s32.totalorder %s27, 1
      %p50 = por %p48, %p49
      %p52 = scmp.ne.s32.totalorder %s35, %s51
      %p53 = scmp.eq.s32.totalorder %s27, 0
      %p54 = por %p52, %p53
      %s56 = sadd.s32 %s55, 1
      %p59 = scmp.eq.s32.totalorder %s21, 1
      %p60 = scmp.ne.s32.totalorder %s55, %s57
      %p61 = scmp.eq.s32.totalorder %s21, 0
      %p62 = por %p60, %p61
      %p63 = scmp.ne.s32.totalorder %s55, %s57
      %p64 = scmp.eq.s32.totalorder %s26, 1
      %p65 = por %p63, %p64
      %p66 = scmp.ne.s32.totalorder %s57, %s58
      %p67 = scmp.eq.s32.totalorder %s26, 0
      %p68 = por %p66, %p67
      %p69 = scmp.ne.s32.totalorder %s57, %s58
      %p70 = scmp.eq.s32.totalorder %s27, 1
      %p71 = por %p69, %p70
      %p73 = scmp.ne.s32.totalorder %s58, %s72
      %p74 = scmp.eq.s32.totalorder %s27, 0
      %p75 = por %p73, %p74
      %s77 = sadd.s32 %s76, 1
      %p80 = scmp.eq.s32.totalorder %s21, 1
      %p81 = scmp.ne.s32.totalorder %s76, %s78
      %p82 = scmp.eq.s32.totalorder %s21, 0
      %p83 = por %p81, %p82
      %p84 = scmp.ne.s32.totalorder %s76, %s78
      %p85 = scmp.eq.s32.totalorder %s26, 1
      %p86 = por %p84, %p85
      %p87 = scmp.ne.s32.totalorder %s78, %s79
      %p88 = scmp.eq.s32.totalorder %s26, 0
      %p89 = por %p87, %p88
      %p90 = scmp.ne.s32.totalorder %s78, %s79
      %p91 = scmp.eq.s32.totalorder %s27, 1
      %p92 = por %p90, %p91
      %p94 = scmp.ne.s32.totalorder %s79, %s93
      %p95 = scmp.eq.s32.totalorder %s27, 0
      %p96 = por %p94, %p95
      %s98 = sadd.s32 %s97, 1
      %p101 = scmp.eq.s32.totalorder %s21, 1
      %p102 = scmp.ne.s32.totalorder %s97, %s99
      %p103 = scmp.eq.s32.totalorder %s21, 0
      %p104 = por %p102, %p103
      %p105 = scmp.ne.s32.totalorder %s97, %s99
      %p106 = scmp.eq.s32.totalorder %s26, 1
      %p107 = por %p105, %p106
      %p108 = scmp.ne.s32.totalorder %s99, %s100
      %p109 = scmp.eq.s32.totalorder %s26, 0
      %p110 = por %p108, %p109
      %p111 = scmp.ne.s32.totalorder %s99, %s100
      %p112 = scmp.eq.s32.totalorder %s27, 1
      %p113 = por %p111, %p112
      %p115 = scmp.ne.s32.totalorder %s100, %s114
      %p116 = scmp.eq.s32.totalorder %s27, 0
      %p117 = por %p115, %p116
      %s119 = sadd.s32 %s118, 1
      %p122 = scmp.eq.s32.totalorder %s21, 1
      %p123 = scmp.ne.s32.totalorder %s118, %s120
      %p124 = scmp.eq.s32.totalorder %s21, 0
      %p125 = por %p123, %p124
      %p126 = scmp.ne.s32.totalorder %s118, %s120
      %p127 = scmp.eq.s32.totalorder %s26, 1
      %p128 = por %p126, %p127
      %p129 = scmp.ne.s32.totalorder %s120, %s121
      %p130 = scmp.eq.s32.totalorder %s26, 0
      %p131 = por %p129, %p130
      %p132 = scmp.ne.s32.totalorder %s120, %s121
      %p133 = scmp.eq.s32.totalorder %s27, 1
      %p134 = por %p132, %p133
      %p136 = scmp.ne.s32.totalorder %s121, %s135
      %p137 = scmp.eq.s32.totalorder %s27, 0
      %p138 = por %p136, %p137
      %s140 = sadd.s32 %s139, 1
      %p143 = scmp.eq.s32.totalorder %s21, 1
      %p144 = scmp.ne.s32.totalorder %s139, %s141
      %p145 = scmp.eq.s32.totalorder %s21, 0
      %p146 = por %p144, %p145
      %p147 = scmp.ne.s32.totalorder %s139, %s141
      %p148 = scmp.eq.s32.totalorder %s26, 1
      %p149 = por %p147, %p148
      %p150 = scmp.ne.s32.totalorder %s141, %s142
      %p151 = scmp.eq.s32.totalorder %s26, 0
      %p152 = por %p150, %p151
      %p153 = scmp.ne.s32.totalorder %s141, %s142
      %p154 = scmp.eq.s32.totalorder %s27, 1
      %p155 = por %p153, %p154
      %p157 = scmp.ne.s32.totalorder %s142, %s156
      %p158 = scmp.eq.s32.totalorder %s27, 0
      %p159 = por %p157, %p158
      %s161 = sadd.s32 %s160, 1
      %p164 = scmp.eq.s32.totalorder %s21, 1
      %p165 = scmp.ne.s32.totalorder %s160, %s162
      %p166 = scmp.eq.s32.totalorder %s21, 0
      %p167 = por %p165, %p166
      %p168 = scmp.ne.s32.totalorder %s160, %s162
      %p169 = scmp.eq.s32.totalorder %s26, 1
      %p170 = por %p168, %p169
      %p171 = scmp.ne.s32.totalorder %s162, %s163
      %p172 = scmp.eq.s32.totalorder %s26, 0
      %p173 = por %p171, %p172
      %p174 = scmp.ne.s32.totalorder %s162, %s163
      %p175 = scmp.eq.s32.totalorder %s27, 1
      %p176 = por %p174, %p175
      %p178 = scmp.ne.s32.totalorder %s163, %s177
      %p179 = scmp.eq.s32.totalorder %s27, 0
      %p180 = por %p178, %p179
      %s181 = ssub.s32 %s21, %s28
      %p182 = scmp.eq.s32.totalorder %s181, 0
      %s184 = sadd.s32 %s183, 1
      %s185 = scalar_select %p182, %s183, %s184
      %p188 = pneg %p182
      %p189 = scmp.eq.s32.totalorder %s21, 1
      %p190 = por %p188, %p189
      %p191 = scmp.ne.s32.totalorder %s183, %s186
      %p192 = scmp.eq.s32.totalorder %s21, 0
      %p193 = por %p191, %p192
      %p194 = scmp.ne.s32.totalorder %s183, %s186
      %p195 = scmp.eq.s32.totalorder %s26, 1
      %p196 = por %p194, %p195
      %p197 = scmp.ne.s32.totalorder %s186, %s187
      %p198 = scmp.eq.s32.totalorder %s26, 0
      %p199 = por %p197, %p198
      %p200 = scmp.ne.s32.totalorder %s186, %s187
      %p201 = scmp.eq.s32.totalorder %s27, 1
      %p202 = por %p200, %p201
      %p204 = scmp.ne.s32.totalorder %s187, %s203
      %p205 = scmp.eq.s32.totalorder %s27, 0
      %p206 = por %p204, %p205
      %p207 = scmp.le.s32.totalorder 1, %s21
      %p208 = scmp.lt.s32.totalorder %s21, 3
      %p209 = pnand %p207, %p208
      %p210 = pneg %p209
      // Predicated region
      $region9: #{tpu_custom_call.1} parent=5 // pred_check
        _
      $region10: #{tpu_custom_call.1} parent=5 // pred_check_branch
        %212 = sbr.rel (%p209) target = $region12
      $region11: #{tpu_custom_call.1} parent=5 // pred_region
        %s213 = ssub.s32 %s21, 1
        // Predicated region
        $region13: #{tpu_custom_call.1} parent=11 // pred_check
          %p214 = pneg %p68
        $region14: #{tpu_custom_call.1} parent=11 // pred_check_branch
          %216 = sbr.rel (%p214) target = $region16
        $region15: #{tpu_custom_call.1} parent=11 // pred_region
          %s218 = ssub.s32 28672, 28672
          %219 = vsyncadd [#allocation6], %s218
          %s220 = sshll.u32 [#allocation5], 4
          %s221 = int_to_ptr.vmem [resolvable:$true] %s220
          %226 = dma.hbm_to_vmem [thread:$0]  %s1, 28672, %s221, [#allocation6], 256, 256, 16
        $region16: #{tpu_custom_call.1} parent=11 // pred_fallthru
          _
        // Predicated region
        $region17: #{tpu_custom_call.1} parent=11 // pred_check
          %p227 = pneg %p89
        $region18: #{tpu_custom_call.1} parent=11 // pred_check_branch
          %229 = sbr.rel (%p227) target = $region20
        $region19: #{tpu_custom_call.1} parent=11 // pred_region
          _
        $region20: #{tpu_custom_call.1} parent=11 // pred_fallthru
          _
        // Predicated region
        $region21: #{tpu_custom_call.1} parent=11 // pred_check
          %p230 = pneg %p110
        $region22: #{tpu_custom_call.1} parent=11 // pred_check_branch
          %232 = sbr.rel (%p230) target = $region24
        $region23: #{tpu_custom_call.1} parent=11 // pred_region
          %s234 = ssub.s32 16384, 16384
          %235 = vsyncadd [#allocation6], %s234
          %s236 = sshll.u32 [#allocation7], 4
          %s237 = int_to_ptr.vmem [resolvable:$true] %s236
          %242 = dma.hbm_to_vmem [thread:$0]  %s3, 16384, %s237, [#allocation6], 256, 256, 16
        $region24: #{tpu_custom_call.1} parent=11 // pred_fallthru
          _
        // Predicated region
        $region25: #{tpu_custom_call.1} parent=11 // pred_check
          %p243 = pneg %p131
        $region26: #{tpu_custom_call.1} parent=11 // pred_check_branch
          %245 = sbr.rel (%p243) target = $region28
        $region27: #{tpu_custom_call.1} parent=11 // pred_region
          _
        $region28: #{tpu_custom_call.1} parent=11 // pred_fallthru
          _
        // Predicated region
        $region29: #{tpu_custom_call.1} parent=11 // pred_check
          %p246 = pneg %p152
        $region30: #{tpu_custom_call.1} parent=11 // pred_check_branch
          %248 = sbr.rel (%p246) target = $region32
        $region31: #{tpu_custom_call.1} parent=11 // pred_region
          %s250 = ssub.s32 4096, 4096
          %251 = vsyncadd [#allocation9], %s250
          %s252 = sshll.u32 [#allocation8], 4
          %s253 = int_to_ptr.vmem [resolvable:$true] %s252
          %258 = dma.hbm_to_vmem [thread:$0]  %s5, 4096, %s253, [#allocation9], 64, 64, 4
        $region32: #{tpu_custom_call.1} parent=11 // pred_fallthru
          _
        // Predicated region
        $region33: #{tpu_custom_call.1} parent=11 // pred_check
          %p259 = pneg %p173
        $region34: #{tpu_custom_call.1} parent=11 // pred_check_branch
          %261 = sbr.rel (%p259) target = $region36
        $region35: #{tpu_custom_call.1} parent=11 // pred_region
          _
        $region36: #{tpu_custom_call.1} parent=11 // pred_fallthru
          _
      $region12: #{tpu_custom_call.1} parent=5 // pred_fallthru
        _
      %p262 = scmp.lt.s32.totalorder %s21, 2
      // Predicated region
      $region37: #{tpu_custom_call.1} parent=5 // pred_check
        %p263 = pneg %p262
      $region38: #{tpu_custom_call.1} parent=5 // pred_check_branch
        %265 = sbr.rel (%p263) target = $region40
      $region39: #{tpu_custom_call.1} parent=5 // pred_region
        // Predicated region
        $region41: #{tpu_custom_call.1} parent=39 // pred_check
          %p266 = pneg %p41
        $region42: #{tpu_custom_call.1} parent=39 // pred_check_branch
          %268 = sbr.rel (%p266) target = $region44
        $region43: #{tpu_custom_call.1} parent=39 // pred_region
          %s269 = sand.u32 %s31, 1
          %s270 = scalar_lea.sflag [#allocation3], %s269
          %s271 = sand.u32 %s31, 1
          %s272 = smul.addr %s271, 112
          %s273 = scalar_lea.vmem [#allocation2], %s272
          %s274 = smul.u32 2, %s21
          %s276 = ssub.s32 1792, 1792
          %277 = vsyncadd %s270, %s276
          %s278 = smul.addr %s274, 7
          %s279 = smul.addr %s278, 128
          %s280 = scalar_lea.hbm %s0, %s279
          %s281 = sshll.u32 %s273, 4
          %s282 = int_to_ptr.vmem [resolvable:$true] %s281
          %287 = dma.hbm_to_vmem [thread:$0]  %s280, 1792, %s282, %s270, 896, 896, 56
        $region44: #{tpu_custom_call.1} parent=39 // pred_fallthru
          _
      $region40: #{tpu_custom_call.1} parent=5 // pred_fallthru
        _
      %p288 = scmp.le.s32.totalorder 1, %s21
      %p289 = scmp.lt.s32.totalorder %s21, 3
      %p290 = pnand %p288, %p289
      %p291 = pneg %p290
      // Predicated region
      $region45: #{tpu_custom_call.1} parent=5 // pred_check
        _
      $region46: #{tpu_custom_call.1} parent=5 // pred_check_branch
        %293 = sbr.rel (%p290) target = $region48
      $region47: #{tpu_custom_call.1} parent=5 // pred_region
        %s294 = ssub.s32 %s21, 1
        %s295 = sand.u32 %s34, 1
        %s296 = scalar_lea.sflag [#allocation3], %s295
        %s297 = sand.u32 %s34, 1
        %s298 = smul.addr %s297, 112
        %s299 = scalar_lea.vmem [#allocation2], %s298
        // Predicated region
        $region49: #{tpu_custom_call.1} parent=47 // pred_check
          %p300 = pneg %p47
        $region50: #{tpu_custom_call.1} parent=47 // pred_check_branch
          %302 = sbr.rel (%p300) target = $region52
        $region51: #{tpu_custom_call.1} parent=47 // pred_region
          %303 = dma.done %s296, 1792
        $region52: #{tpu_custom_call.1} parent=47 // pred_fallthru
          _
        // Predicated region
        $region53: #{tpu_custom_call.1} parent=47 // pred_check
          %p304 = pneg %p68
        $region54: #{tpu_custom_call.1} parent=47 // pred_check_branch
          %306 = sbr.rel (%p304) target = $region56
        $region55: #{tpu_custom_call.1} parent=47 // pred_region
          %307 = dma.done [#allocation6], 28672
        $region56: #{tpu_custom_call.1} parent=47 // pred_fallthru
          _
        // Predicated region
        $region57: #{tpu_custom_call.1} parent=47 // pred_check
          %p308 = pneg %p110
        $region58: #{tpu_custom_call.1} parent=47 // pred_check_branch
          %310 = sbr.rel (%p308) target = $region60
        $region59: #{tpu_custom_call.1} parent=47 // pred_region
          %311 = dma.done [#allocation6], 16384
        $region60: #{tpu_custom_call.1} parent=47 // pred_fallthru
          _
        // Predicated region
        $region61: #{tpu_custom_call.1} parent=47 // pred_check
          %p312 = pneg %p152
        $region62: #{tpu_custom_call.1} parent=47 // pred_check_branch
          %314 = sbr.rel (%p312) target = $region64
        $region63: #{tpu_custom_call.1} parent=47 // pred_region
          %315 = dma.done [#allocation9], 4096
        $region64: #{tpu_custom_call.1} parent=47 // pred_fallthru
          _
        %s316 = sand.u32 %s34, 1
        %s317 = scalar_lea.sflag [#allocation3], %s316
        %s318 = sand.u32 %s34, 1
        %s319 = smul.addr %s318, 112
        %s320 = scalar_lea.vmem [#allocation2], %s319
        %p321 = pneg %p47
        %p322 = pneg %p44
        %p323 = pneg %p68
        %p324 = pneg %p65
        %p325 = pneg %p89
        %p326 = pneg %p86
        %p327 = pneg %p110
        %p328 = pneg %p107
        %p329 = pneg %p131
        %p330 = pneg %p128
        %p331 = pneg %p152
        %p332 = pneg %p149
        %p333 = pneg %p173
        %p334 = pneg %p170
        %p335 = pneg %p199
        %p336 = pneg %p196
        %s337 = sand.u32 %s186, 1
        %s338 = scalar_lea.sflag [#allocation4], %s337
        %s339 = sand.u32 %s186, 1
        %s340 = smul.addr %s339, 16
        %s341 = scalar_lea.vmem [#allocation10], %s340
        %s342 = smul.u32 2, %s26
        %s343 = smul.u32 2, %s26
        %v345 = vld [vmem:[%s299] sm:$0xff]
        %v346 = vld [vmem:[%s299 + $0x8] sm:$0xff]
        %v347 = vld [vmem:[%s299 + $0x10] sm:$0xff]
        %v348 = vld [vmem:[%s299 + $0x18] sm:$0xff]
        %v349 = vld [vmem:[%s299 + $0x20] sm:$0xff]
        %v350 = vld [vmem:[%s299 + $0x28] sm:$0xff]
        %v351 = vld [vmem:[%s299 + $0x30] sm:$0xff]
        %v352 = vld [vmem:[%s299 + $0x38] sm:$0xff]
        %v353 = vld [vmem:[%s299 + $0x40] sm:$0xff]
        %v354 = vld [vmem:[%s299 + $0x48] sm:$0xff]
        %v355 = vld [vmem:[%s299 + $0x50] sm:$0xff]
        %v356 = vld [vmem:[%s299 + $0x58] sm:$0xff]
        %v357 = vld [vmem:[%s299 + $0x60] sm:$0xff]
        %v358 = vld [vmem:[%s299 + $0x68] sm:$0xff]
        %v359 = vpack.c.bf16 %v352, %v345
        %v360 = vpack.c.bf16 %v353, %v346
        %v361 = vpack.c.bf16 %v354, %v347
        %v362 = vpack.c.bf16 %v355, %v348
        %v363 = vpack.c.bf16 %v356, %v349
        %v364 = vpack.c.bf16 %v357, %v350
        %v365 = vpack.c.bf16 %v358, %v351
        %v366 = vld [vmem:[#allocation5] sm:$0xff]
        %v367 = vld [vmem:[#allocation5 + $0x8] sm:$0xff]
        %v368 = vld [vmem:[#allocation5 + $0x10] sm:$0xff]
        %v369 = vld [vmem:[#allocation5 + $0x18] sm:$0xff]
        %v370 = vld [vmem:[#allocation5 + $0x20] sm:$0xff]
        %v371 = vld [vmem:[#allocation5 + $0x28] sm:$0xff]
        %v372 = vld [vmem:[#allocation5 + $0x30] sm:$0xff]
        %v373 = vld [vmem:[#allocation5 + $0x38] sm:$0xff]
        %v374 = vld [vmem:[#allocation5 + $0x40] sm:$0xff]
        %v375 = vld [vmem:[#allocation5 + $0x48] sm:$0xff]
        %v376 = vld [vmem:[#allocation5 + $0x50] sm:$0xff]
        %v377 = vld [vmem:[#allocation5 + $0x58] sm:$0xff]
        %v378 = vld [vmem:[#allocation5 + $0x60] sm:$0xff]
        %v379 = vld [vmem:[#allocation5 + $0x68] sm:$0xff]
        %v380 = vld [vmem:[#allocation5 + $0x70] sm:$0xff]
        %v381 = vld [vmem:[#allocation5 + $0x78] sm:$0xff]
        %v382 = vld [vmem:[#allocation5 + $0x80] sm:$0xff]
        %v383 = vld [vmem:[#allocation5 + $0x88] sm:$0xff]
        %v384 = vld [vmem:[#allocation5 + $0x90] sm:$0xff]
        %v385 = vld [vmem:[#allocation5 + $0x98] sm:$0xff]
        %v386 = vld [vmem:[#allocation5 + $0xa0] sm:$0xff]
        %v387 = vld [vmem:[#allocation5 + $0xa8] sm:$0xff]
        %v388 = vld [vmem:[#allocation5 + $0xb0] sm:$0xff]
        %v389 = vld [vmem:[#allocation5 + $0xb8] sm:$0xff]
        %v390 = vld [vmem:[#allocation5 + $0xc0] sm:$0xff]
        %v391 = vld [vmem:[#allocation5 + $0xc8] sm:$0xff]
        %v392 = vld [vmem:[#allocation5 + $0xd0] sm:$0xff]
        %v393 = vld [vmem:[#allocation5 + $0xd8] sm:$0xff]
        %v394 = vld [vmem:[#allocation5 + $0xe0] sm:$0xff]
        %v395 = vld [vmem:[#allocation5 + $0xe8] sm:$0xff]
        %v396 = vld [vmem:[#allocation5 + $0xf0] sm:$0xff]
        %v397 = vld [vmem:[#allocation5 + $0xf8] sm:$0xff]
        %v398 = vld [vmem:[#allocation5 + $0x100] sm:$0xff]
        %v399 = vld [vmem:[#allocation5 + $0x108] sm:$0xff]
        %v400 = vld [vmem:[#allocation5 + $0x110] sm:$0xff]
        %v401 = vld [vmem:[#allocation5 + $0x118] sm:$0xff]
        %v402 = vld [vmem:[#allocation5 + $0x120] sm:$0xff]
        %v403 = vld [vmem:[#allocation5 + $0x128] sm:$0xff]
        %v404 = vld [vmem:[#allocation5 + $0x130] sm:$0xff]
        %v405 = vld [vmem:[#allocation5 + $0x138] sm:$0xff]
        %v406 = vld [vmem:[#allocation5 + $0x140] sm:$0xff]
        %v407 = vld [vmem:[#allocation5 + $0x148] sm:$0xff]
        %v408 = vld [vmem:[#allocation5 + $0x150] sm:$0xff]
        %v409 = vld [vmem:[#allocation5 + $0x158] sm:$0xff]
        %v410 = vld [vmem:[#allocation5 + $0x160] sm:$0xff]
        %v411 = vld [vmem:[#allocation5 + $0x168] sm:$0xff]
        %v412 = vld [vmem:[#allocation5 + $0x170] sm:$0xff]
        %v413 = vld [vmem:[#allocation5 + $0x178] sm:$0xff]
        %v414 = vld [vmem:[#allocation5 + $0x180] sm:$0xff]
        %v415 = vld [vmem:[#allocation5 + $0x188] sm:$0xff]
        %v416 = vld [vmem:[#allocation5 + $0x190] sm:$0xff]
        %v417 = vld [vmem:[#allocation5 + $0x198] sm:$0xff]
        %v418 = vld [vmem:[#allocation5 + $0x1a0] sm:$0xff]
        %v419 = vld [vmem:[#allocation5 + $0x1a8] sm:$0xff]
        %v420 = vld [vmem:[#allocation5 + $0x1b0] sm:$0xff]
        %v421 = vld [vmem:[#allocation5 + $0x1b8] sm:$0xff]
        %v422 = vld [vmem:[#allocation5 + $0x1c0] sm:$0xff]
        %v423 = vld [vmem:[#allocation5 + $0x1c8] sm:$0xff]
        %v424 = vld [vmem:[#allocation5 + $0x1d0] sm:$0xff]
        %v425 = vld [vmem:[#allocation5 + $0x1d8] sm:$0xff]
        %v426 = vld [vmem:[#allocation5 + $0x1e0] sm:$0xff]
        %v427 = vld [vmem:[#allocation5 + $0x1e8] sm:$0xff]
        %v428 = vld [vmem:[#allocation5 + $0x1f0] sm:$0xff]
        %v429 = vld [vmem:[#allocation5 + $0x1f8] sm:$0xff]
        %v430 = vld [vmem:[#allocation5 + $0x200] sm:$0xff]
        %v431 = vld [vmem:[#allocation5 + $0x208] sm:$0xff]
        %v432 = vld [vmem:[#allocation5 + $0x210] sm:$0xff]
        %v433 = vld [vmem:[#allocation5 + $0x218] sm:$0xff]
        %v434 = vld [vmem:[#allocation5 + $0x220] sm:$0xff]
        %v435 = vld [vmem:[#allocation5 + $0x228] sm:$0xff]
        %v436 = vld [vmem:[#allocation5 + $0x230] sm:$0xff]
        %v437 = vld [vmem:[#allocation5 + $0x238] sm:$0xff]
        %v438 = vld [vmem:[#allocation5 + $0x240] sm:$0xff]
        %v439 = vld [vmem:[#allocation5 + $0x248] sm:$0xff]
        %v440 = vld [vmem:[#allocation5 + $0x250] sm:$0xff]
        %v441 = vld [vmem:[#allocation5 + $0x258] sm:$0xff]
        %v442 = vld [vmem:[#allocation5 + $0x260] sm:$0xff]
        %v443 = vld [vmem:[#allocation5 + $0x268] sm:$0xff]
        %v444 = vld [vmem:[#allocation5 + $0x270] sm:$0xff]
        %v445 = vld [vmem:[#allocation5 + $0x278] sm:$0xff]
        %v446 = vld [vmem:[#allocation5 + $0x280] sm:$0xff]
        %v447 = vld [vmem:[#allocation5 + $0x288] sm:$0xff]
        %v448 = vld [vmem:[#allocation5 + $0x290] sm:$0xff]
        %v449 = vld [vmem:[#allocation5 + $0x298] sm:$0xff]
        %v450 = vld [vmem:[#allocation5 + $0x2a0] sm:$0xff]
        %v451 = vld [vmem:[#allocation5 + $0x2a8] sm:$0xff]
        %v452 = vld [vmem:[#allocation5 + $0x2b0] sm:$0xff]
        %v453 = vld [vmem:[#allocation5 + $0x2b8] sm:$0xff]
        %v454 = vld [vmem:[#allocation5 + $0x2c0] sm:$0xff]
        %v455 = vld [vmem:[#allocation5 + $0x2c8] sm:$0xff]
        %v456 = vld [vmem:[#allocation5 + $0x2d0] sm:$0xff]
        %v457 = vld [vmem:[#allocation5 + $0x2d8] sm:$0xff]
        %v458 = vld [vmem:[#allocation5 + $0x2e0] sm:$0xff]
        %v459 = vld [vmem:[#allocation5 + $0x2e8] sm:$0xff]
        %v460 = vld [vmem:[#allocation5 + $0x2f0] sm:$0xff]
        %v461 = vld [vmem:[#allocation5 + $0x2f8] sm:$0xff]
        %v462 = vld [vmem:[#allocation5 + $0x300] sm:$0xff]
        %v463 = vld [vmem:[#allocation5 + $0x308] sm:$0xff]
        %v464 = vld [vmem:[#allocation5 + $0x310] sm:$0xff]
        %v465 = vld [vmem:[#allocation5 + $0x318] sm:$0xff]
        %v466 = vld [vmem:[#allocation5 + $0x320] sm:$0xff]
        %v467 = vld [vmem:[#allocation5 + $0x328] sm:$0xff]
        %v468 = vld [vmem:[#allocation5 + $0x330] sm:$0xff]
        %v469 = vld [vmem:[#allocation5 + $0x338] sm:$0xff]
        %v470 = vld [vmem:[#allocation5 + $0x340] sm:$0xff]
        %v471 = vld [vmem:[#allocation5 + $0x348] sm:$0xff]
        %v472 = vld [vmem:[#allocation5 + $0x350] sm:$0xff]
        %v473 = vld [vmem:[#allocation5 + $0x358] sm:$0xff]
        %v474 = vld [vmem:[#allocation5 + $0x360] sm:$0xff]
        %v475 = vld [vmem:[#allocation5 + $0x368] sm:$0xff]
        %v476 = vld [vmem:[#allocation5 + $0x370] sm:$0xff]
        %v477 = vld [vmem:[#allocation5 + $0x378] sm:$0xff]
        %v478 = vld [vmem:[#allocation5 + $0x380] sm:$0xff]
        %v479 = vld [vmem:[#allocation5 + $0x388] sm:$0xff]
        %v480 = vld [vmem:[#allocation5 + $0x390] sm:$0xff]
        %v481 = vld [vmem:[#allocation5 + $0x398] sm:$0xff]
        %v482 = vld [vmem:[#allocation5 + $0x3a0] sm:$0xff]
        %v483 = vld [vmem:[#allocation5 + $0x3a8] sm:$0xff]
        %v484 = vld [vmem:[#allocation5 + $0x3b0] sm:$0xff]
        %v485 = vld [vmem:[#allocation5 + $0x3b8] sm:$0xff]
        %v486 = vld [vmem:[#allocation5 + $0x3c0] sm:$0xff]
        %v487 = vld [vmem:[#allocation5 + $0x3c8] sm:$0xff]
        %v488 = vld [vmem:[#allocation5 + $0x3d0] sm:$0xff]
        %v489 = vld [vmem:[#allocation5 + $0x3d8] sm:$0xff]
        %v490 = vld [vmem:[#allocation5 + $0x3e0] sm:$0xff]
        %v491 = vld [vmem:[#allocation5 + $0x3e8] sm:$0xff]
        %v492 = vld [vmem:[#allocation5 + $0x3f0] sm:$0xff]
        %v493 = vld [vmem:[#allocation5 + $0x3f8] sm:$0xff]
        %v494 = vld [vmem:[#allocation5 + $0x400] sm:$0xff]
        %v495 = vld [vmem:[#allocation5 + $0x408] sm:$0xff]
        %v496 = vld [vmem:[#allocation5 + $0x410] sm:$0xff]
        %v497 = vld [vmem:[#allocation5 + $0x418] sm:$0xff]
        %v498 = vld [vmem:[#allocation5 + $0x420] sm:$0xff]
        %v499 = vld [vmem:[#allocation5 + $0x428] sm:$0xff]
        %v500 = vld [vmem:[#allocation5 + $0x430] sm:$0xff]
        %v501 = vld [vmem:[#allocation5 + $0x438] sm:$0xff]
        %v502 = vld [vmem:[#allocation5 + $0x440] sm:$0xff]
        %v503 = vld [vmem:[#allocation5 + $0x448] sm:$0xff]
        %v504 = vld [vmem:[#allocation5 + $0x450] sm:$0xff]
        %v505 = vld [vmem:[#allocation5 + $0x458] sm:$0xff]
        %v506 = vld [vmem:[#allocation5 + $0x460] sm:$0xff]
        %v507 = vld [vmem:[#allocation5 + $0x468] sm:$0xff]
        %v508 = vld [vmem:[#allocation5 + $0x470] sm:$0xff]
        %v509 = vld [vmem:[#allocation5 + $0x478] sm:$0xff]
        %v510 = vld [vmem:[#allocation5 + $0x480] sm:$0xff]
        %v511 = vld [vmem:[#allocation5 + $0x488] sm:$0xff]
        %v512 = vld [vmem:[#allocation5 + $0x490] sm:$0xff]
        %v513 = vld [vmem:[#allocation5 + $0x498] sm:$0xff]
        %v514 = vld [vmem:[#allocation5 + $0x4a0] sm:$0xff]
        %v515 = vld [vmem:[#allocation5 + $0x4a8] sm:$0xff]
        %v516 = vld [vmem:[#allocation5 + $0x4b0] sm:$0xff]
        %v517 = vld [vmem:[#allocation5 + $0x4b8] sm:$0xff]
        %v518 = vld [vmem:[#allocation5 + $0x4c0] sm:$0xff]
        %v519 = vld [vmem:[#allocation5 + $0x4c8] sm:$0xff]
        %v520 = vld [vmem:[#allocation5 + $0x4d0] sm:$0xff]
        %v521 = vld [vmem:[#allocation5 + $0x4d8] sm:$0xff]
        %v522 = vld [vmem:[#allocation5 + $0x4e0] sm:$0xff]
        %v523 = vld [vmem:[#allocation5 + $0x4e8] sm:$0xff]
        %v524 = vld [vmem:[#allocation5 + $0x4f0] sm:$0xff]
        %v525 = vld [vmem:[#allocation5 + $0x4f8] sm:$0xff]
        %v526 = vld [vmem:[#allocation5 + $0x500] sm:$0xff]
        %v527 = vld [vmem:[#allocation5 + $0x508] sm:$0xff]
        %v528 = vld [vmem:[#allocation5 + $0x510] sm:$0xff]
        %v529 = vld [vmem:[#allocation5 + $0x518] sm:$0xff]
        %v530 = vld [vmem:[#allocation5 + $0x520] sm:$0xff]
        %v531 = vld [vmem:[#allocation5 + $0x528] sm:$0xff]
        %v532 = vld [vmem:[#allocation5 + $0x530] sm:$0xff]
        %v533 = vld [vmem:[#allocation5 + $0x538] sm:$0xff]
        %v534 = vld [vmem:[#allocation5 + $0x540] sm:$0xff]
        %v535 = vld [vmem:[#allocation5 + $0x548] sm:$0xff]
        %v536 = vld [vmem:[#allocation5 + $0x550] sm:$0xff]
        %v537 = vld [vmem:[#allocation5 + $0x558] sm:$0xff]
        %v538 = vld [vmem:[#allocation5 + $0x560] sm:$0xff]
        %v539 = vld [vmem:[#allocation5 + $0x568] sm:$0xff]
        %v540 = vld [vmem:[#allocation5 + $0x570] sm:$0xff]
        %v541 = vld [vmem:[#allocation5 + $0x578] sm:$0xff]
        %v542 = vld [vmem:[#allocation5 + $0x580] sm:$0xff]
        %v543 = vld [vmem:[#allocation5 + $0x588] sm:$0xff]
        %v544 = vld [vmem:[#allocation5 + $0x590] sm:$0xff]
        %v545 = vld [vmem:[#allocation5 + $0x598] sm:$0xff]
        %v546 = vld [vmem:[#allocation5 + $0x5a0] sm:$0xff]
        %v547 = vld [vmem:[#allocation5 + $0x5a8] sm:$0xff]
        %v548 = vld [vmem:[#allocation5 + $0x5b0] sm:$0xff]
        %v549 = vld [vmem:[#allocation5 + $0x5b8] sm:$0xff]
        %v550 = vld [vmem:[#allocation5 + $0x5c0] sm:$0xff]
        %v551 = vld [vmem:[#allocation5 + $0x5c8] sm:$0xff]
        %v552 = vld [vmem:[#allocation5 + $0x5d0] sm:$0xff]
        %v553 = vld [vmem:[#allocation5 + $0x5d8] sm:$0xff]
        %v554 = vld [vmem:[#allocation5 + $0x5e0] sm:$0xff]
        %v555 = vld [vmem:[#allocation5 + $0x5e8] sm:$0xff]
        %v556 = vld [vmem:[#allocation5 + $0x5f0] sm:$0xff]
        %v557 = vld [vmem:[#allocation5 + $0x5f8] sm:$0xff]
        %v558 = vld [vmem:[#allocation5 + $0x600] sm:$0xff]
        %v559 = vld [vmem:[#allocation5 + $0x608] sm:$0xff]
        %v560 = vld [vmem:[#allocation5 + $0x610] sm:$0xff]
        %v561 = vld [vmem:[#allocation5 + $0x618] sm:$0xff]
        %v562 = vld [vmem:[#allocation5 + $0x620] sm:$0xff]
        %v563 = vld [vmem:[#allocation5 + $0x628] sm:$0xff]
        %v564 = vld [vmem:[#allocation5 + $0x630] sm:$0xff]
        %v565 = vld [vmem:[#allocation5 + $0x638] sm:$0xff]
        %v566 = vld [vmem:[#allocation5 + $0x640] sm:$0xff]
        %v567 = vld [vmem:[#allocation5 + $0x648] sm:$0xff]
        %v568 = vld [vmem:[#allocation5 + $0x650] sm:$0xff]
        %v569 = vld [vmem:[#allocation5 + $0x658] sm:$0xff]
        %v570 = vld [vmem:[#allocation5 + $0x660] sm:$0xff]
        %v571 = vld [vmem:[#allocation5 + $0x668] sm:$0xff]
        %v572 = vld [vmem:[#allocation5 + $0x670] sm:$0xff]
        %v573 = vld [vmem:[#allocation5 + $0x678] sm:$0xff]
        %v574 = vld [vmem:[#allocation5 + $0x680] sm:$0xff]
        %v575 = vld [vmem:[#allocation5 + $0x688] sm:$0xff]
        %v576 = vld [vmem:[#allocation5 + $0x690] sm:$0xff]
        %v577 = vld [vmem:[#allocation5 + $0x698] sm:$0xff]
        %v578 = vld [vmem:[#allocation5 + $0x6a0] sm:$0xff]
        %v579 = vld [vmem:[#allocation5 + $0x6a8] sm:$0xff]
        %v580 = vld [vmem:[#allocation5 + $0x6b0] sm:$0xff]
        %v581 = vld [vmem:[#allocation5 + $0x6b8] sm:$0xff]
        %v582 = vld [vmem:[#allocation5 + $0x6c0] sm:$0xff]
        %v583 = vld [vmem:[#allocation5 + $0x6c8] sm:$0xff]
        %v584 = vld [vmem:[#allocation5 + $0x6d0] sm:$0xff]
        %v585 = vld [vmem:[#allocation5 + $0x6d8] sm:$0xff]
        %v586 = vld [vmem:[#allocation5 + $0x6e0] sm:$0xff]
        %v587 = vld [vmem:[#allocation5 + $0x6e8] sm:$0xff]
        %v588 = vld [vmem:[#allocation5 + $0x6f0] sm:$0xff]
        %v589 = vld [vmem:[#allocation5 + $0x6f8] sm:$0xff]
        %v590 = vld [vmem:[%s2] sm:$0xf]
        %v592 = vlaneseq
        %v593 = vshrl.u32 %v592, 7
        %v594 = vsub.s32 0, %v593
        %v595 = vrot.slane %v590, %v594
        %v596 = vlaneseq
        %v597 = vshrl.u32 %v596, 7
        %v598 = vsub.s32 1, %v597
        %v599 = vrot.slane %v590, %v598
        %v600 = vlaneseq
        %v601 = vshrl.u32 %v600, 7
        %v602 = vsub.s32 2, %v601
        %v603 = vrot.slane %v590, %v602
        %v604 = vlaneseq
        %v605 = vshrl.u32 %v604, 7
        %v606 = vsub.s32 3, %v605
        %v607 = vrot.slane %v590, %v606
        %v836 = vunpack.c.l.b16 %v366
        %v837 = vunpack.c.h.b16 %v366
        %v838 = vunpack.c.l.b16 %v367
        %v839 = vunpack.c.h.b16 %v367
        %v840 = vunpack.c.l.b16 %v368
        %v841 = vunpack.c.h.b16 %v368
        %v842 = vunpack.c.l.b16 %v369
        %v843 = vunpack.c.h.b16 %v369
        %v844 = vunpack.c.l.b16 %v370
        %v845 = vunpack.c.h.b16 %v370
        %v846 = vunpack.c.l.b16 %v371
        %v847 = vunpack.c.h.b16 %v371
        %v848 = vunpack.c.l.b16 %v372
        %v849 = vunpack.c.h.b16 %v372
        %v850 = vunpack.c.l.b16 %v373
        %v851 = vunpack.c.h.b16 %v373
        %v852 = vunpack.c.l.b16 %v374
        %v853 = vunpack.c.h.b16 %v374
        %v854 = vunpack.c.l.b16 %v375
        %v855 = vunpack.c.h.b16 %v375
        %v856 = vunpack.c.l.b16 %v376
        %v857 = vunpack.c.h.b16 %v376
        %v858 = vunpack.c.l.b16 %v377
        %v859 = vunpack.c.h.b16 %v377
        %v860 = vunpack.c.l.b16 %v378
        %v861 = vunpack.c.h.b16 %v378
        %v862 = vunpack.c.l.b16 %v379
        %v863 = vunpack.c.h.b16 %v379
        %v864 = vunpack.c.l.b16 %v380
        %v865 = vunpack.c.h.b16 %v380
        %v866 = vunpack.c.l.b16 %v381
        %v867 = vunpack.c.h.b16 %v381
        %v868 = vunpack.c.l.b16 %v382
        %v869 = vunpack.c.h.b16 %v382
        %v870 = vunpack.c.l.b16 %v383
        %v871 = vunpack.c.h.b16 %v383
        %v872 = vunpack.c.l.b16 %v384
        %v873 = vunpack.c.h.b16 %v384
        %v874 = vunpack.c.l.b16 %v385
        %v875 = vunpack.c.h.b16 %v385
        %v876 = vunpack.c.l.b16 %v386
        %v877 = vunpack.c.h.b16 %v386
        %v878 = vunpack.c.l.b16 %v387
        %v879 = vunpack.c.h.b16 %v387
        %v880 = vunpack.c.l.b16 %v388
        %v881 = vunpack.c.h.b16 %v388
        %v882 = vunpack.c.l.b16 %v389
        %v883 = vunpack.c.h.b16 %v389
        %v884 = vunpack.c.l.b16 %v390
        %v885 = vunpack.c.h.b16 %v390
        %v886 = vunpack.c.l.b16 %v391
        %v887 = vunpack.c.h.b16 %v391
        %v888 = vunpack.c.l.b16 %v392
        %v889 = vunpack.c.h.b16 %v392
        %v890 = vunpack.c.l.b16 %v393
        %v891 = vunpack.c.h.b16 %v393
        %v892 = vunpack.c.l.b16 %v394
        %v893 = vunpack.c.h.b16 %v394
        %v894 = vunpack.c.l.b16 %v395
        %v895 = vunpack.c.h.b16 %v395
        %v896 = vunpack.c.l.b16 %v396
        %v897 = vunpack.c.h.b16 %v396
        %v898 = vunpack.c.l.b16 %v397
        %v899 = vunpack.c.h.b16 %v397
        %v900 = vunpack.c.l.b16 %v398
        %v901 = vunpack.c.h.b16 %v398
        %v902 = vunpack.c.l.b16 %v399
        %v903 = vunpack.c.h.b16 %v399
        %v904 = vunpack.c.l.b16 %v400
        %v905 = vunpack.c.h.b16 %v400
        %v906 = vunpack.c.l.b16 %v401
        %v907 = vunpack.c.h.b16 %v401
        %v908 = vunpack.c.l.b16 %v402
        %v909 = vunpack.c.h.b16 %v402
        %v910 = vunpack.c.l.b16 %v403
        %v911 = vunpack.c.h.b16 %v403
        %v912 = vunpack.c.l.b16 %v404
        %v913 = vunpack.c.h.b16 %v404
        %v914 = vunpack.c.l.b16 %v405
        %v915 = vunpack.c.h.b16 %v405
        %v916 = vunpack.c.l.b16 %v406
        %v917 = vunpack.c.h.b16 %v406
        %v918 = vunpack.c.l.b16 %v407
        %v919 = vunpack.c.h.b16 %v407
        %v920 = vunpack.c.l.b16 %v408
        %v921 = vunpack.c.h.b16 %v408
        %v922 = vunpack.c.l.b16 %v409
        %v923 = vunpack.c.h.b16 %v409
        %v924 = vunpack.c.l.b16 %v410
        %v925 = vunpack.c.h.b16 %v410
        %v926 = vunpack.c.l.b16 %v411
        %v927 = vunpack.c.h.b16 %v411
        %v928 = vunpack.c.l.b16 %v412
        %v929 = vunpack.c.h.b16 %v412
        %v930 = vunpack.c.l.b16 %v413
        %v931 = vunpack.c.h.b16 %v413
        %v932 = vunpack.c.l.b16 %v414
        %v933 = vunpack.c.h.b16 %v414
        %v934 = vunpack.c.l.b16 %v415
        %v935 = vunpack.c.h.b16 %v415
        %v936 = vunpack.c.l.b16 %v416
        %v937 = vunpack.c.h.b16 %v416
        %v938 = vunpack.c.l.b16 %v417
        %v939 = vunpack.c.h.b16 %v417
        %v940 = vunpack.c.l.b16 %v418
        %v941 = vunpack.c.h.b16 %v418
        %v942 = vunpack.c.l.b16 %v419
        %v943 = vunpack.c.h.b16 %v419
        %v944 = vunpack.c.l.b16 %v420
        %v945 = vunpack.c.h.b16 %v420
        %v946 = vunpack.c.l.b16 %v421
        %v947 = vunpack.c.h.b16 %v421
        %v948 = vunpack.c.l.b16 %v422
        %v949 = vunpack.c.h.b16 %v422
        %v950 = vunpack.c.l.b16 %v423
        %v951 = vunpack.c.h.b16 %v423
        %v952 = vunpack.c.l.b16 %v424
        %v953 = vunpack.c.h.b16 %v424
        %v954 = vunpack.c.l.b16 %v425
        %v955 = vunpack.c.h.b16 %v425
        %v956 = vunpack.c.l.b16 %v426
        %v957 = vunpack.c.h.b16 %v426
        %v958 = vunpack.c.l.b16 %v427
        %v959 = vunpack.c.h.b16 %v427
        %v960 = vunpack.c.l.b16 %v428
        %v961 = vunpack.c.h.b16 %v428
        %v962 = vunpack.c.l.b16 %v429
        %v963 = vunpack.c.h.b16 %v429
        %v964 = vunpack.c.l.b16 %v430
        %v965 = vunpack.c.h.b16 %v430
        %v966 = vunpack.c.l.b16 %v431
        %v967 = vunpack.c.h.b16 %v431
        %v968 = vunpack.c.l.b16 %v432
        %v969 = vunpack.c.h.b16 %v432
        %v970 = vunpack.c.l.b16 %v433
        %v971 = vunpack.c.h.b16 %v433
        %v972 = vunpack.c.l.b16 %v434
        %v973 = vunpack.c.h.b16 %v434
        %v974 = vunpack.c.l.b16 %v435
        %v975 = vunpack.c.h.b16 %v435
        %v976 = vunpack.c.l.b16 %v436
        %v977 = vunpack.c.h.b16 %v436
        %v978 = vunpack.c.l.b16 %v437
        %v979 = vunpack.c.h.b16 %v437
        %v980 = vunpack.c.l.b16 %v438
        %v981 = vunpack.c.h.b16 %v438
        %v982 = vunpack.c.l.b16 %v439
        %v983 = vunpack.c.h.b16 %v439
        %v984 = vunpack.c.l.b16 %v440
        %v985 = vunpack.c.h.b16 %v440
        %v986 = vunpack.c.l.b16 %v441
        %v987 = vunpack.c.h.b16 %v441
        %v988 = vunpack.c.l.b16 %v442
        %v989 = vunpack.c.h.b16 %v442
        %v990 = vunpack.c.l.b16 %v443
        %v991 = vunpack.c.h.b16 %v443
        %v992 = vunpack.c.l.b16 %v444
        %v993 = vunpack.c.h.b16 %v444
        %v994 = vunpack.c.l.b16 %v445
        %v995 = vunpack.c.h.b16 %v445
        %v996 = vunpack.c.l.b16 %v446
        %v997 = vunpack.c.h.b16 %v446
        %v998 = vunpack.c.l.b16 %v447
        %v999 = vunpack.c.h.b16 %v447
        %v1000 = vunpack.c.l.b16 %v448
        %v1001 = vunpack.c.h.b16 %v448
        %v1002 = vunpack.c.l.b16 %v449
        %v1003 = vunpack.c.h.b16 %v449
        %v1004 = vunpack.c.l.b16 %v450
        %v1005 = vunpack.c.h.b16 %v450
        %v1006 = vunpack.c.l.b16 %v451
        %v1007 = vunpack.c.h.b16 %v451
        %v1008 = vunpack.c.l.b16 %v452
        %v1009 = vunpack.c.h.b16 %v452
        %v1010 = vunpack.c.l.b16 %v453
        %v1011 = vunpack.c.h.b16 %v453
        %v1012 = vunpack.c.l.b16 %v454
        %v1013 = vunpack.c.h.b16 %v454
        %v1014 = vunpack.c.l.b16 %v455
        %v1015 = vunpack.c.h.b16 %v455
        %v1016 = vunpack.c.l.b16 %v456
        %v1017 = vunpack.c.h.b16 %v456
        %v1018 = vunpack.c.l.b16 %v457
        %v1019 = vunpack.c.h.b16 %v457
        %v1020 = vunpack.c.l.b16 %v458
        %v1021 = vunpack.c.h.b16 %v458
        %v1022 = vunpack.c.l.b16 %v459
        %v1023 = vunpack.c.h.b16 %v459
        %v1024 = vunpack.c.l.b16 %v460
        %v1025 = vunpack.c.h.b16 %v460
        %v1026 = vunpack.c.l.b16 %v461
        %v1027 = vunpack.c.h.b16 %v461
        %v1028 = vunpack.c.l.b16 %v462
        %v1029 = vunpack.c.h.b16 %v462
        %v1030 = vunpack.c.l.b16 %v463
        %v1031 = vunpack.c.h.b16 %v463
        %v1032 = vunpack.c.l.b16 %v464
        %v1033 = vunpack.c.h.b16 %v464
        %v1034 = vunpack.c.l.b16 %v465
        %v1035 = vunpack.c.h.b16 %v465
        %v1036 = vunpack.c.l.b16 %v466
        %v1037 = vunpack.c.h.b16 %v466
        %v1038 = vunpack.c.l.b16 %v467
        %v1039 = vunpack.c.h.b16 %v467
        %v1040 = vunpack.c.l.b16 %v468
        %v1041 = vunpack.c.h.b16 %v468
        %v1042 = vunpack.c.l.b16 %v469
        %v1043 = vunpack.c.h.b16 %v469
        %v1044 = vunpack.c.l.b16 %v470
        %v1045 = vunpack.c.h.b16 %v470
        %v1046 = vunpack.c.l.b16 %v471
        %v1047 = vunpack.c.h.b16 %v471
        %v1048 = vunpack.c.l.b16 %v472
        %v1049 = vunpack.c.h.b16 %v472
        %v1050 = vunpack.c.l.b16 %v473
        %v1051 = vunpack.c.h.b16 %v473
        %v1052 = vunpack.c.l.b16 %v474
        %v1053 = vunpack.c.h.b16 %v474
        %v1054 = vunpack.c.l.b16 %v475
        %v1055 = vunpack.c.h.b16 %v475
        %v1056 = vunpack.c.l.b16 %v476
        %v1057 = vunpack.c.h.b16 %v476
        %v1058 = vunpack.c.l.b16 %v477
        %v1059 = vunpack.c.h.b16 %v477
        %v1060 = vunpack.c.l.b16 %v478
        %v1061 = vunpack.c.h.b16 %v478
        %v1062 = vunpack.c.l.b16 %v479
        %v1063 = vunpack.c.h.b16 %v479
        %v1064 = vunpack.c.l.b16 %v480
        %v1065 = vunpack.c.h.b16 %v480
        %v1066 = vunpack.c.l.b16 %v481
        %v1067 = vunpack.c.h.b16 %v481
        %v1068 = vunpack.c.l.b16 %v482
        %v1069 = vunpack.c.h.b16 %v482
        %v1070 = vunpack.c.l.b16 %v483
        %v1071 = vunpack.c.h.b16 %v483
        %v1072 = vunpack.c.l.b16 %v484
        %v1073 = vunpack.c.h.b16 %v484
        %v1074 = vunpack.c.l.b16 %v485
        %v1075 = vunpack.c.h.b16 %v485
        %v1076 = vunpack.c.l.b16 %v486
        %v1077 = vunpack.c.h.b16 %v486
        %v1078 = vunpack.c.l.b16 %v487
        %v1079 = vunpack.c.h.b16 %v487
        %v1080 = vunpack.c.l.b16 %v488
        %v1081 = vunpack.c.h.b16 %v488
        %v1082 = vunpack.c.l.b16 %v489
        %v1083 = vunpack.c.h.b16 %v489
        %v1084 = vunpack.c.l.b16 %v490
        %v1085 = vunpack.c.h.b16 %v490
        %v1086 = vunpack.c.l.b16 %v491
        %v1087 = vunpack.c.h.b16 %v491
        %v1088 = vunpack.c.l.b16 %v492
        %v1089 = vunpack.c.h.b16 %v492
        %v1090 = vunpack.c.l.b16 %v493
        %v1091 = vunpack.c.h.b16 %v493
        %v1092 = vunpack.c.l.b16 %v494
        %v1093 = vunpack.c.h.b16 %v494
        %v1094 = vunpack.c.l.b16 %v495
        %v1095 = vunpack.c.h.b16 %v495
        %v1096 = vunpack.c.l.b16 %v496
        %v1097 = vunpack.c.h.b16 %v496
        %v1098 = vunpack.c.l.b16 %v497
        %v1099 = vunpack.c.h.b16 %v497
        %v1100 = vunpack.c.l.b16 %v498
        %v1101 = vunpack.c.h.b16 %v498
        %v1102 = vunpack.c.l.b16 %v499
        %v1103 = vunpack.c.h.b16 %v499
        %v1104 = vunpack.c.l.b16 %v500
        %v1105 = vunpack.c.h.b16 %v500
        %v1106 = vunpack.c.l.b16 %v501
        %v1107 = vunpack.c.h.b16 %v501
        %v1108 = vunpack.c.l.b16 %v502
        %v1109 = vunpack.c.h.b16 %v502
        %v1110 = vunpack.c.l.b16 %v503
        %v1111 = vunpack.c.h.b16 %v503
        %v1112 = vunpack.c.l.b16 %v504
        %v1113 = vunpack.c.h.b16 %v504
        %v1114 = vunpack.c.l.b16 %v505
        %v1115 = vunpack.c.h.b16 %v505
        %v1116 = vunpack.c.l.b16 %v506
        %v1117 = vunpack.c.h.b16 %v506
        %v1118 = vunpack.c.l.b16 %v507
        %v1119 = vunpack.c.h.b16 %v507
        %v1120 = vunpack.c.l.b16 %v508
        %v1121 = vunpack.c.h.b16 %v508
        %v1122 = vunpack.c.l.b16 %v509
        %v1123 = vunpack.c.h.b16 %v509
        %v1124 = vunpack.c.l.b16 %v510
        %v1125 = vunpack.c.h.b16 %v510
        %v1126 = vunpack.c.l.b16 %v511
        %v1127 = vunpack.c.h.b16 %v511
        %v1128 = vunpack.c.l.b16 %v512
        %v1129 = vunpack.c.h.b16 %v512
        %v1130 = vunpack.c.l.b16 %v513
        %v1131 = vunpack.c.h.b16 %v513
        %v1132 = vunpack.c.l.b16 %v514
        %v1133 = vunpack.c.h.b16 %v514
        %v1134 = vunpack.c.l.b16 %v515
        %v1135 = vunpack.c.h.b16 %v515
        %v1136 = vunpack.c.l.b16 %v516
        %v1137 = vunpack.c.h.b16 %v516
        %v1138 = vunpack.c.l.b16 %v517
        %v1139 = vunpack.c.h.b16 %v517
        %v1140 = vunpack.c.l.b16 %v518
        %v1141 = vunpack.c.h.b16 %v518
        %v1142 = vunpack.c.l.b16 %v519
        %v1143 = vunpack.c.h.b16 %v519
        %v1144 = vunpack.c.l.b16 %v520
        %v1145 = vunpack.c.h.b16 %v520
        %v1146 = vunpack.c.l.b16 %v521
        %v1147 = vunpack.c.h.b16 %v521
        %v1148 = vunpack.c.l.b16 %v522
        %v1149 = vunpack.c.h.b16 %v522
        %v1150 = vunpack.c.l.b16 %v523
        %v1151 = vunpack.c.h.b16 %v523
        %v1152 = vunpack.c.l.b16 %v524
        %v1153 = vunpack.c.h.b16 %v524
        %v1154 = vunpack.c.l.b16 %v525
        %v1155 = vunpack.c.h.b16 %v525
        %v1156 = vunpack.c.l.b16 %v526
        %v1157 = vunpack.c.h.b16 %v526
        %v1158 = vunpack.c.l.b16 %v527
        %v1159 = vunpack.c.h.b16 %v527
        %v1160 = vunpack.c.l.b16 %v528
        %v1161 = vunpack.c.h.b16 %v528
        %v1162 = vunpack.c.l.b16 %v529
        %v1163 = vunpack.c.h.b16 %v529
        %v1164 = vunpack.c.l.b16 %v530
        %v1165 = vunpack.c.h.b16 %v530
        %v1166 = vunpack.c.l.b16 %v531
        %v1167 = vunpack.c.h.b16 %v531
        %v1168 = vunpack.c.l.b16 %v532
        %v1169 = vunpack.c.h.b16 %v532
        %v1170 = vunpack.c.l.b16 %v533
        %v1171 = vunpack.c.h.b16 %v533
        %v1172 = vunpack.c.l.b16 %v534
        %v1173 = vunpack.c.h.b16 %v534
        %v1174 = vunpack.c.l.b16 %v535
        %v1175 = vunpack.c.h.b16 %v535
        %v1176 = vunpack.c.l.b16 %v536
        %v1177 = vunpack.c.h.b16 %v536
        %v1178 = vunpack.c.l.b16 %v537
        %v1179 = vunpack.c.h.b16 %v537
        %v1180 = vunpack.c.l.b16 %v538
        %v1181 = vunpack.c.h.b16 %v538
        %v1182 = vunpack.c.l.b16 %v539
        %v1183 = vunpack.c.h.b16 %v539
        %v1184 = vunpack.c.l.b16 %v540
        %v1185 = vunpack.c.h.b16 %v540
        %v1186 = vunpack.c.l.b16 %v541
        %v1187 = vunpack.c.h.b16 %v541
        %v1188 = vunpack.c.l.b16 %v542
        %v1189 = vunpack.c.h.b16 %v542
        %v1190 = vunpack.c.l.b16 %v543
        %v1191 = vunpack.c.h.b16 %v543
        %v1192 = vunpack.c.l.b16 %v544
        %v1193 = vunpack.c.h.b16 %v544
        %v1194 = vunpack.c.l.b16 %v545
        %v1195 = vunpack.c.h.b16 %v545
        %v1196 = vunpack.c.l.b16 %v546
        %v1197 = vunpack.c.h.b16 %v546
        %v1198 = vunpack.c.l.b16 %v547
        %v1199 = vunpack.c.h.b16 %v547
        %v1200 = vunpack.c.l.b16 %v548
        %v1201 = vunpack.c.h.b16 %v548
        %v1202 = vunpack.c.l.b16 %v549
        %v1203 = vunpack.c.h.b16 %v549
        %v1204 = vunpack.c.l.b16 %v550
        %v1205 = vunpack.c.h.b16 %v550
        %v1206 = vunpack.c.l.b16 %v551
        %v1207 = vunpack.c.h.b16 %v551
        %v1208 = vunpack.c.l.b16 %v552
        %v1209 = vunpack.c.h.b16 %v552
        %v1210 = vunpack.c.l.b16 %v553
        %v1211 = vunpack.c.h.b16 %v553
        %v1212 = vunpack.c.l.b16 %v554
        %v1213 = vunpack.c.h.b16 %v554
        %v1214 = vunpack.c.l.b16 %v555
        %v1215 = vunpack.c.h.b16 %v555
        %v1216 = vunpack.c.l.b16 %v556
        %v1217 = vunpack.c.h.b16 %v556
        %v1218 = vunpack.c.l.b16 %v557
        %v1219 = vunpack.c.h.b16 %v557
        %v1220 = vunpack.c.l.b16 %v558
        %v1221 = vunpack.c.h.b16 %v558
        %v1222 = vunpack.c.l.b16 %v559
        %v1223 = vunpack.c.h.b16 %v559
        %v1224 = vunpack.c.l.b16 %v560
        %v1225 = vunpack.c.h.b16 %v560
        %v1226 = vunpack.c.l.b16 %v561
        %v1227 = vunpack.c.h.b16 %v561
        %v1228 = vunpack.c.l.b16 %v562
        %v1229 = vunpack.c.h.b16 %v562
        %v1230 = vunpack.c.l.b16 %v563
        %v1231 = vunpack.c.h.b16 %v563
        %v1232 = vunpack.c.l.b16 %v564
        %v1233 = vunpack.c.h.b16 %v564
        %v1234 = vunpack.c.l.b16 %v565
        %v1235 = vunpack.c.h.b16 %v565
        %v1236 = vunpack.c.l.b16 %v566
        %v1237 = vunpack.c.h.b16 %v566
        %v1238 = vunpack.c.l.b16 %v567
        %v1239 = vunpack.c.h.b16 %v567
        %v1240 = vunpack.c.l.b16 %v568
        %v1241 = vunpack.c.h.b16 %v568
        %v1242 = vunpack.c.l.b16 %v569
        %v1243 = vunpack.c.h.b16 %v569
        %v1244 = vunpack.c.l.b16 %v570
        %v1245 = vunpack.c.h.b16 %v570
        %v1246 = vunpack.c.l.b16 %v571
        %v1247 = vunpack.c.h.b16 %v571
        %v1248 = vunpack.c.l.b16 %v572
        %v1249 = vunpack.c.h.b16 %v572
        %v1250 = vunpack.c.l.b16 %v573
        %v1251 = vunpack.c.h.b16 %v573
        %v1252 = vunpack.c.l.b16 %v574
        %v1253 = vunpack.c.h.b16 %v574
        %v1254 = vunpack.c.l.b16 %v575
        %v1255 = vunpack.c.h.b16 %v575
        %v1256 = vunpack.c.l.b16 %v576
        %v1257 = vunpack.c.h.b16 %v576
        %v1258 = vunpack.c.l.b16 %v577
        %v1259 = vunpack.c.h.b16 %v577
        %v1260 = vunpack.c.l.b16 %v578
        %v1261 = vunpack.c.h.b16 %v578
        %v1262 = vunpack.c.l.b16 %v579
        %v1263 = vunpack.c.h.b16 %v579
        %v1264 = vunpack.c.l.b16 %v580
        %v1265 = vunpack.c.h.b16 %v580
        %v1266 = vunpack.c.l.b16 %v581
        %v1267 = vunpack.c.h.b16 %v581
        %v1268 = vunpack.c.l.b16 %v582
        %v1269 = vunpack.c.h.b16 %v582
        %v1270 = vunpack.c.l.b16 %v583
        %v1271 = vunpack.c.h.b16 %v583
        %v1272 = vunpack.c.l.b16 %v584
        %v1273 = vunpack.c.h.b16 %v584
        %v1274 = vunpack.c.l.b16 %v585
        %v1275 = vunpack.c.h.b16 %v585
        %v1276 = vunpack.c.l.b16 %v586
        %v1277 = vunpack.c.h.b16 %v586
        %v1278 = vunpack.c.l.b16 %v587
        %v1279 = vunpack.c.h.b16 %v587
        %v1280 = vunpack.c.l.b16 %v588
        %v1281 = vunpack.c.h.b16 %v588
        %v1282 = vunpack.c.l.b16 %v589
        %v1283 = vunpack.c.h.b16 %v589
        %v1284 = vpack.c.b16 %v840, %v836
        %v1285 = vpack.c.b16 %v841, %v837
        %v1286 = vpack.c.b16 %v842, %v838
        %v1287 = vpack.c.b16 %v843, %v839
        %v1288 = vpack.c.b16 %v848, %v844
        %v1289 = vpack.c.b16 %v849, %v845
        %v1290 = vpack.c.b16 %v850, %v846
        %v1291 = vpack.c.b16 %v851, %v847
        %v1292 = vpack.c.b16 %v856, %v852
        %v1293 = vpack.c.b16 %v857, %v853
        %v1294 = vpack.c.b16 %v858, %v854
        %v1295 = vpack.c.b16 %v859, %v855
        %v1296 = vpack.c.b16 %v864, %v860
        %v1297 = vpack.c.b16 %v865, %v861
        %v1298 = vpack.c.b16 %v866, %v862
        %v1299 = vpack.c.b16 %v867, %v863
        %v1300 = vpack.c.b16 %v872, %v868
        %v1301 = vpack.c.b16 %v873, %v869
        %v1302 = vpack.c.b16 %v874, %v870
        %v1303 = vpack.c.b16 %v875, %v871
        %v1304 = vpack.c.b16 %v880, %v876
        %v1305 = vpack.c.b16 %v881, %v877
        %v1306 = vpack.c.b16 %v882, %v878
        %v1307 = vpack.c.b16 %v883, %v879
        %v1308 = vpack.c.b16 %v888, %v884
        %v1309 = vpack.c.b16 %v889, %v885
        %v1310 = vpack.c.b16 %v890, %v886
        %v1311 = vpack.c.b16 %v891, %v887
        %v1312 = vpack.c.b16 %v896, %v892
        %v1313 = vpack.c.b16 %v897, %v893
        %v1314 = vpack.c.b16 %v898, %v894
        %v1315 = vpack.c.b16 %v899, %v895
        %v1316 = vpack.c.b16 %v904, %v900
        %v1317 = vpack.c.b16 %v905, %v901
        %v1318 = vpack.c.b16 %v906, %v902
        %v1319 = vpack.c.b16 %v907, %v903
        %v1320 = vpack.c.b16 %v912, %v908
        %v1321 = vpack.c.b16 %v913, %v909
        %v1322 = vpack.c.b16 %v914, %v910
        %v1323 = vpack.c.b16 %v915, %v911
        %v1324 = vpack.c.b16 %v920, %v916
        %v1325 = vpack.c.b16 %v921, %v917
        %v1326 = vpack.c.b16 %v922, %v918
        %v1327 = vpack.c.b16 %v923, %v919
        %v1328 = vpack.c.b16 %v928, %v924
        %v1329 = vpack.c.b16 %v929, %v925
        %v1330 = vpack.c.b16 %v930, %v926
        %v1331 = vpack.c.b16 %v931, %v927
        %v1332 = vpack.c.b16 %v936, %v932
        %v1333 = vpack.c.b16 %v937, %v933
        %v1334 = vpack.c.b16 %v938, %v934
        %v1335 = vpack.c.b16 %v939, %v935
        %v1336 = vpack.c.b16 %v944, %v940
        %v1337 = vpack.c.b16 %v945, %v941
        %v1338 = vpack.c.b16 %v946, %v942
        %v1339 = vpack.c.b16 %v947, %v943
        %v1340 = vpack.c.b16 %v952, %v948
        %v1341 = vpack.c.b16 %v953, %v949
        %v1342 = vpack.c.b16 %v954, %v950
        %v1343 = vpack.c.b16 %v955, %v951
        %v1344 = vpack.c.b16 %v960, %v956
        %v1345 = vpack.c.b16 %v961, %v957
        %v1346 = vpack.c.b16 %v962, %v958
        %v1347 = vpack.c.b16 %v963, %v959
        %v1348 = vpack.c.b16 %v968, %v964
        %v1349 = vpack.c.b16 %v969, %v965
        %v1350 = vpack.c.b16 %v970, %v966
        %v1351 = vpack.c.b16 %v971, %v967
        %v1352 = vpack.c.b16 %v976, %v972
        %v1353 = vpack.c.b16 %v977, %v973
        %v1354 = vpack.c.b16 %v978, %v974
        %v1355 = vpack.c.b16 %v979, %v975
        %v1356 = vpack.c.b16 %v984, %v980
        %v1357 = vpack.c.b16 %v985, %v981
        %v1358 = vpack.c.b16 %v986, %v982
        %v1359 = vpack.c.b16 %v987, %v983
        %v1360 = vpack.c.b16 %v992, %v988
        %v1361 = vpack.c.b16 %v993, %v989
        %v1362 = vpack.c.b16 %v994, %v990
        %v1363 = vpack.c.b16 %v995, %v991
        %v1364 = vpack.c.b16 %v1000, %v996
        %v1365 = vpack.c.b16 %v1001, %v997
        %v1366 = vpack.c.b16 %v1002, %v998
        %v1367 = vpack.c.b16 %v1003, %v999
        %v1368 = vpack.c.b16 %v1008, %v1004
        %v1369 = vpack.c.b16 %v1009, %v1005
        %v1370 = vpack.c.b16 %v1010, %v1006
        %v1371 = vpack.c.b16 %v1011, %v1007
        %v1372 = vpack.c.b16 %v1016, %v1012
        %v1373 = vpack.c.b16 %v1017, %v1013
        %v1374 = vpack.c.b16 %v1018, %v1014
        %v1375 = vpack.c.b16 %v1019, %v1015
        %v1376 = vpack.c.b16 %v1024, %v1020
        %v1377 = vpack.c.b16 %v1025, %v1021
        %v1378 = vpack.c.b16 %v1026, %v1022
        %v1379 = vpack.c.b16 %v1027, %v1023
        %v1380 = vpack.c.b16 %v1032, %v1028
        %v1381 = vpack.c.b16 %v1033, %v1029
        %v1382 = vpack.c.b16 %v1034, %v1030
        %v1383 = vpack.c.b16 %v1035, %v1031
        %v1384 = vpack.c.b16 %v1040, %v1036
        %v1385 = vpack.c.b16 %v1041, %v1037
        %v1386 = vpack.c.b16 %v1042, %v1038
        %v1387 = vpack.c.b16 %v1043, %v1039
        %v1388 = vpack.c.b16 %v1048, %v1044
        %v1389 = vpack.c.b16 %v1049, %v1045
        %v1390 = vpack.c.b16 %v1050, %v1046
        %v1391 = vpack.c.b16 %v1051, %v1047
        %v1392 = vpack.c.b16 %v1056, %v1052
        %v1393 = vpack.c.b16 %v1057, %v1053
        %v1394 = vpack.c.b16 %v1058, %v1054
        %v1395 = vpack.c.b16 %v1059, %v1055
        %v1396 = vpack.c.b16 %v1064, %v1060
        %v1397 = vpack.c.b16 %v1065, %v1061
        %v1398 = vpack.c.b16 %v1066, %v1062
        %v1399 = vpack.c.b16 %v1067, %v1063
        %v1400 = vpack.c.b16 %v1072, %v1068
        %v1401 = vpack.c.b16 %v1073, %v1069
        %v1402 = vpack.c.b16 %v1074, %v1070
        %v1403 = vpack.c.b16 %v1075, %v1071
        %v1404 = vpack.c.b16 %v1080, %v1076
        %v1405 = vpack.c.b16 %v1081, %v1077
        %v1406 = vpack.c.b16 %v1082, %v1078
        %v1407 = vpack.c.b16 %v1083, %v1079
        %v1408 = vpack.c.b16 %v1088, %v1084
        %v1409 = vpack.c.b16 %v1089, %v1085
        %v1410 = vpack.c.b16 %v1090, %v1086
        %v1411 = vpack.c.b16 %v1091, %v1087
        %v1412 = vpack.c.b16 %v1096, %v1092
        %v1413 = vpack.c.b16 %v1097, %v1093
        %v1414 = vpack.c.b16 %v1098, %v1094
        %v1415 = vpack.c.b16 %v1099, %v1095
        %v1416 = vpack.c.b16 %v1104, %v1100
        %v1417 = vpack.c.b16 %v1105, %v1101
        %v1418 = vpack.c.b16 %v1106, %v1102
        %v1419 = vpack.c.b16 %v1107, %v1103
        %v1420 = vpack.c.b16 %v1112, %v1108
        %v1421 = vpack.c.b16 %v1113, %v1109
        %v1422 = vpack.c.b16 %v1114, %v1110
        %v1423 = vpack.c.b16 %v1115, %v1111
        %v1424 = vpack.c.b16 %v1120, %v1116
        %v1425 = vpack.c.b16 %v1121, %v1117
        %v1426 = vpack.c.b16 %v1122, %v1118
        %v1427 = vpack.c.b16 %v1123, %v1119
        %v1428 = vpack.c.b16 %v1128, %v1124
        %v1429 = vpack.c.b16 %v1129, %v1125
        %v1430 = vpack.c.b16 %v1130, %v1126
        %v1431 = vpack.c.b16 %v1131, %v1127
        %v1432 = vpack.c.b16 %v1136, %v1132
        %v1433 = vpack.c.b16 %v1137, %v1133
        %v1434 = vpack.c.b16 %v1138, %v1134
        %v1435 = vpack.c.b16 %v1139, %v1135
        %v1436 = vpack.c.b16 %v1144, %v1140
        %v1437 = vpack.c.b16 %v1145, %v1141
        %v1438 = vpack.c.b16 %v1146, %v1142
        %v1439 = vpack.c.b16 %v1147, %v1143
        %v1440 = vpack.c.b16 %v1152, %v1148
        %v1441 = vpack.c.b16 %v1153, %v1149
        %v1442 = vpack.c.b16 %v1154, %v1150
        %v1443 = vpack.c.b16 %v1155, %v1151
        %v1444 = vpack.c.b16 %v1160, %v1156
        %v1445 = vpack.c.b16 %v1161, %v1157
        %v1446 = vpack.c.b16 %v1162, %v1158
        %v1447 = vpack.c.b16 %v1163, %v1159
        %v1448 = vpack.c.b16 %v1168, %v1164
        %v1449 = vpack.c.b16 %v1169, %v1165
        %v1450 = vpack.c.b16 %v1170, %v1166
        %v1451 = vpack.c.b16 %v1171, %v1167
        %v1452 = vpack.c.b16 %v1176, %v1172
        %v1453 = vpack.c.b16 %v1177, %v1173
        %v1454 = vpack.c.b16 %v1178, %v1174
        %v1455 = vpack.c.b16 %v1179, %v1175
        %v1456 = vpack.c.b16 %v1184, %v1180
        %v1457 = vpack.c.b16 %v1185, %v1181
        %v1458 = vpack.c.b16 %v1186, %v1182
        %v1459 = vpack.c.b16 %v1187, %v1183
        %v1460 = vpack.c.b16 %v1192, %v1188
        %v1461 = vpack.c.b16 %v1193, %v1189
        %v1462 = vpack.c.b16 %v1194, %v1190
        %v1463 = vpack.c.b16 %v1195, %v1191
        %v1464 = vpack.c.b16 %v1200, %v1196
        %v1465 = vpack.c.b16 %v1201, %v1197
        %v1466 = vpack.c.b16 %v1202, %v1198
        %v1467 = vpack.c.b16 %v1203, %v1199
        %v1468 = vpack.c.b16 %v1208, %v1204
        %v1469 = vpack.c.b16 %v1209, %v1205
        %v1470 = vpack.c.b16 %v1210, %v1206
        %v1471 = vpack.c.b16 %v1211, %v1207
        %v1472 = vpack.c.b16 %v1216, %v1212
        %v1473 = vpack.c.b16 %v1217, %v1213
        %v1474 = vpack.c.b16 %v1218, %v1214
        %v1475 = vpack.c.b16 %v1219, %v1215
        %v1476 = vpack.c.b16 %v1224, %v1220
        %v1477 = vpack.c.b16 %v1225, %v1221
        %v1478 = vpack.c.b16 %v1226, %v1222
        %v1479 = vpack.c.b16 %v1227, %v1223
        %v1480 = vpack.c.b16 %v1232, %v1228
        %v1481 = vpack.c.b16 %v1233, %v1229
        %v1482 = vpack.c.b16 %v1234, %v1230
        %v1483 = vpack.c.b16 %v1235, %v1231
        %v1484 = vpack.c.b16 %v1240, %v1236
        %v1485 = vpack.c.b16 %v1241, %v1237
        %v1486 = vpack.c.b16 %v1242, %v1238
        %v1487 = vpack.c.b16 %v1243, %v1239
        %v1488 = vpack.c.b16 %v1248, %v1244
        %v1489 = vpack.c.b16 %v1249, %v1245
        %v1490 = vpack.c.b16 %v1250, %v1246
        %v1491 = vpack.c.b16 %v1251, %v1247
        %v1492 = vpack.c.b16 %v1256, %v1252
        %v1493 = vpack.c.b16 %v1257, %v1253
        %v1494 = vpack.c.b16 %v1258, %v1254
        %v1495 = vpack.c.b16 %v1259, %v1255
        %v1496 = vpack.c.b16 %v1264, %v1260
        %v1497 = vpack.c.b16 %v1265, %v1261
        %v1498 = vpack.c.b16 %v1266, %v1262
        %v1499 = vpack.c.b16 %v1267, %v1263
        %v1500 = vpack.c.b16 %v1272, %v1268
        %v1501 = vpack.c.b16 %v1273, %v1269
        %v1502 = vpack.c.b16 %v1274, %v1270
        %v1503 = vpack.c.b16 %v1275, %v1271
        %v1504 = vpack.c.b16 %v1280, %v1276
        %v1505 = vpack.c.b16 %v1281, %v1277
        %v1506 = vpack.c.b16 %v1282, %v1278
        %v1507 = vpack.c.b16 %v1283, %v1279
        %1732 = vmatprep.subr.bf16.mxu0 %v1285
        %1733 = vmatpush1.bf16.msra.mxu0 %v1284
        %1734 = vmatprep.subr.bf16.mxu0 %v1289
        %1735 = vmatpush1.bf16.msra.mxu0 %v1288
        %1736 = vmatprep.subr.bf16.mxu0 %v1293
        %1737 = vmatpush1.bf16.msra.mxu0 %v1292
        %1738 = vmatprep.subr.bf16.mxu0 %v1297
        %1739 = vmatpush1.bf16.msra.mxu0 %v1296
        %1740 = vmatprep.subr.bf16.mxu0 %v1301
        %1741 = vmatpush1.bf16.msra.mxu0 %v1300
        %1742 = vmatprep.subr.bf16.mxu0 %v1305
        %1743 = vmatpush1.bf16.msra.mxu0 %v1304
        %1744 = vmatprep.subr.bf16.mxu0 %v1309
        %1745 = vmatpush1.bf16.msra.mxu0 %v1308
        %1746 = vmatprep.subr.bf16.mxu0 %v1313
        %1747 = vmatpush1.bf16.msra.mxu0 %v1312
        %1748 = vmatprep.subr.bf16.mxu0 %v1317
        %1749 = vmatpush1.bf16.msra.mxu0 %v1316
        %1750 = vmatprep.subr.bf16.mxu0 %v1321
        %1751 = vmatpush1.bf16.msra.mxu0 %v1320
        %1752 = vmatprep.subr.bf16.mxu0 %v1325
        %1753 = vmatpush1.bf16.msra.mxu0 %v1324
        %1754 = vmatprep.subr.bf16.mxu0 %v1329
        %1755 = vmatpush1.bf16.msra.mxu0 %v1328
        %1756 = vmatprep.subr.bf16.mxu0 %v1333
        %1757 = vmatpush1.bf16.msra.mxu0 %v1332
        %1758 = vmatprep.subr.bf16.mxu0 %v1337
        %1759 = vmatpush1.bf16.msra.mxu0 %v1336
        %1760 = vmatprep.subr.bf16.mxu0 %v1341
        %1761 = vmatpush1.bf16.msra.mxu0 %v1340
        %1762 = vmatprep.subr.bf16.mxu0 %v1345
        %1763 = vmatpush1.bf16.msra.mxu0 %v1344
        %1764 = vmatprep.mubr.bf16.mxu0 %v360
        %1765 = vmatmul.mubr.bf16.gmra.mrb[0].mxu0 %v359
        %v1766 = vpop.f32.mrb[0].mxu0
        %v1767 = vadd.f32 %v595, %v1766
        %v1768 = vpop.f32.mrb[0].mxu0
        %v1769 = vadd.f32 %v599, %v1768
        %v1770 = vpop.f32.mrb[0].mxu0
        %v1771 = vadd.f32 %v595, %v1770
        %v1772 = vpop.f32.mrb[0].mxu0
        %v1773 = vadd.f32 %v599, %v1772
        %1774 = vdwg.mxu0
        %1775 = vmatprep.subr.bf16.mxu0 %v1349
        %1776 = vmatpush1.bf16.msra.mxu0 %v1348
        %1777 = vmatprep.subr.bf16.mxu0 %v1353
        %1778 = vmatpush1.bf16.msra.mxu0 %v1352
        %1779 = vmatprep.subr.bf16.mxu0 %v1357
        %1780 = vmatpush1.bf16.msra.mxu0 %v1356
        %1781 = vmatprep.subr.bf16.mxu0 %v1361
        %1782 = vmatpush1.bf16.msra.mxu0 %v1360
        %1783 = vmatprep.subr.bf16.mxu0 %v1365
        %1784 = vmatpush1.bf16.msra.mxu0 %v1364
        %1785 = vmatprep.subr.bf16.mxu0 %v1369
        %1786 = vmatpush1.bf16.msra.mxu0 %v1368
        %1787 = vmatprep.subr.bf16.mxu0 %v1373
        %1788 = vmatpush1.bf16.msra.mxu0 %v1372
        %1789 = vmatprep.subr.bf16.mxu0 %v1377
        %1790 = vmatpush1.bf16.msra.mxu0 %v1376
        %1791 = vmatprep.subr.bf16.mxu0 %v1381
        %1792 = vmatpush1.bf16.msra.mxu0 %v1380
        %1793 = vmatprep.subr.bf16.mxu0 %v1385
        %1794 = vmatpush1.bf16.msra.mxu0 %v1384
        %1795 = vmatprep.subr.bf16.mxu0 %v1389
        %1796 = vmatpush1.bf16.msra.mxu0 %v1388
        %1797 = vmatprep.subr.bf16.mxu0 %v1393
        %1798 = vmatpush1.bf16.msra.mxu0 %v1392
        %1799 = vmatprep.subr.bf16.mxu0 %v1397
        %1800 = vmatpush1.bf16.msra.mxu0 %v1396
        %1801 = vmatprep.subr.bf16.mxu0 %v1401
        %1802 = vmatpush1.bf16.msra.mxu0 %v1400
        %1803 = vmatprep.subr.bf16.mxu0 %v1405
        %1804 = vmatpush1.bf16.msra.mxu0 %v1404
        %1805 = vmatprep.subr.bf16.mxu0 %v1409
        %1806 = vmatpush1.bf16.msra.mxu0 %v1408
        %1807 = vmatprep.mubr.bf16.mxu0 %v362
        %1808 = vmatmul.mubr.bf16.gmra.mrb[0].mxu0 %v361
        %v1809 = vpop.f32.mrb[0].mxu0
        %v1810 = vadd.f32 %v1767, %v1809
        %v1811 = vpop.f32.mrb[0].mxu0
        %v1812 = vadd.f32 %v1769, %v1811
        %v1813 = vpop.f32.mrb[0].mxu0
        %v1814 = vadd.f32 %v1771, %v1813
        %v1815 = vpop.f32.mrb[0].mxu0
        %v1816 = vadd.f32 %v1773, %v1815
        %1817 = vdwg.mxu0
        %1818 = vmatprep.subr.bf16.mxu0 %v1413
        %1819 = vmatpush1.bf16.msra.mxu0 %v1412
        %1820 = vmatprep.subr.bf16.mxu0 %v1417
        %1821 = vmatpush1.bf16.msra.mxu0 %v1416
        %1822 = vmatprep.subr.bf16.mxu0 %v1421
        %1823 = vmatpush1.bf16.msra.mxu0 %v1420
        %1824 = vmatprep.subr.bf16.mxu0 %v1425
        %1825 = vmatpush1.bf16.msra.mxu0 %v1424
        %1826 = vmatprep.subr.bf16.mxu0 %v1429
        %1827 = vmatpush1.bf16.msra.mxu0 %v1428
        %1828 = vmatprep.subr.bf16.mxu0 %v1433
        %1829 = vmatpush1.bf16.msra.mxu0 %v1432
        %1830 = vmatprep.subr.bf16.mxu0 %v1437
        %1831 = vmatpush1.bf16.msra.mxu0 %v1436
        %1832 = vmatprep.subr.bf16.mxu0 %v1441
        %1833 = vmatpush1.bf16.msra.mxu0 %v1440
        %1834 = vmatprep.subr.bf16.mxu0 %v1445
        %1835 = vmatpush1.bf16.msra.mxu0 %v1444
        %1836 = vmatprep.subr.bf16.mxu0 %v1449
        %1837 = vmatpush1.bf16.msra.mxu0 %v1448
        %1838 = vmatprep.subr.bf16.mxu0 %v1453
        %1839 = vmatpush1.bf16.msra.mxu0 %v1452
        %1840 = vmatprep.subr.bf16.mxu0 %v1457
        %1841 = vmatpush1.bf16.msra.mxu0 %v1456
        %1842 = vmatprep.subr.bf16.mxu0 %v1461
        %1843 = vmatpush1.bf16.msra.mxu0 %v1460
        %1844 = vmatprep.subr.bf16.mxu0 %v1465
        %1845 = vmatpush1.bf16.msra.mxu0 %v1464
        %1846 = vmatprep.subr.bf16.mxu0 %v1469
        %1847 = vmatpush1.bf16.msra.mxu0 %v1468
        %1848 = vmatprep.subr.bf16.mxu0 %v1473
        %1849 = vmatpush1.bf16.msra.mxu0 %v1472
        %1850 = vmatprep.mubr.bf16.mxu0 %v364
        %1851 = vmatmul.mubr.bf16.gmra.mrb[0].mxu0 %v363
        %v1852 = vpop.f32.mrb[0].mxu0
        %v1853 = vadd.f32 %v1810, %v1852
        %v1854 = vpop.f32.mrb[0].mxu0
        %v1855 = vadd.f32 %v1812, %v1854
        %v1856 = vpop.f32.mrb[0].mxu0
        %v1857 = vadd.f32 %v1814, %v1856
        %v1858 = vpop.f32.mrb[0].mxu0
        %v1859 = vadd.f32 %v1816, %v1858
        %1860 = vdwg.mxu0
        %1861 = vmatprep.subr.bf16.mxu0 %v1477
        %1862 = vmatpush1.bf16.msra.mxu0 %v1476
        %1863 = vmatprep.subr.bf16.mxu0 %v1481
        %1864 = vmatpush1.bf16.msra.mxu0 %v1480
        %1865 = vmatprep.subr.bf16.mxu0 %v1485
        %1866 = vmatpush1.bf16.msra.mxu0 %v1484
        %1867 = vmatprep.subr.bf16.mxu0 %v1489
        %1868 = vmatpush1.bf16.msra.mxu0 %v1488
        %1869 = vmatprep.subr.bf16.mxu0 %v1493
        %1870 = vmatpush1.bf16.msra.mxu0 %v1492
        %1871 = vmatprep.subr.bf16.mxu0 %v1497
        %1872 = vmatpush1.bf16.msra.mxu0 %v1496
        %1873 = vmatprep.subr.bf16.mxu0 %v1501
        %1874 = vmatpush1.bf16.msra.mxu0 %v1500
        %1875 = vmatprep.subr.bf16.mxu0 %v1505
        %1876 = vmatpush1.bf16.msra.mxu0 %v1504
        %1877 = vmatprep.subr.bf16.mxu0 0
        %1878 = vmatpush1.bf16.msra.mxu0 0
        %1879 = vmatprep.subr.bf16.mxu0 0
        %1880 = vmatpush1.bf16.msra.mxu0 0
        %1881 = vmatprep.subr.bf16.mxu0 0
        %1882 = vmatpush1.bf16.msra.mxu0 0
        %1883 = vmatprep.subr.bf16.mxu0 0
        %1884 = vmatpush1.bf16.msra.mxu0 0
        %1885 = vmatprep.subr.bf16.mxu0 0
        %1886 = vmatpush1.bf16.msra.mxu0 0
        %1887 = vmatprep.subr.bf16.mxu0 0
        %1888 = vmatpush1.bf16.msra.mxu0 0
        %1889 = vmatprep.subr.bf16.mxu0 0
        %1890 = vmatpush1.bf16.msra.mxu0 0
        %1891 = vmatprep.subr.bf16.mxu0 0
        %1892 = vmatpush1.bf16.msra.mxu0 0
        %1893 = vmatprep.mubr.bf16.mxu0 0
        %1894 = vmatmul.mubr.bf16.gmra.mrb[0].mxu0 %v365
        %v1895 = vpop.f32.mrb[0].mxu0
        %v1896 = vadd.f32 %v1853, %v1895
        %v1897 = vpop.f32.mrb[0].mxu0
        %v1898 = vadd.f32 %v1855, %v1897
        %v1899 = vpop.f32.mrb[0].mxu0
        %v1900 = vadd.f32 %v1857, %v1899
        %v1901 = vpop.f32.mrb[0].mxu0
        %v1902 = vadd.f32 %v1859, %v1901
        %1903 = vdwg.mxu0
        %1904 = vmatprep.subr.bf16.mxu0 %v1287
        %1905 = vmatpush1.bf16.msra.mxu0 %v1286
        %1906 = vmatprep.subr.bf16.mxu0 %v1291
        %1907 = vmatpush1.bf16.msra.mxu0 %v1290
        %1908 = vmatprep.subr.bf16.mxu0 %v1295
        %1909 = vmatpush1.bf16.msra.mxu0 %v1294
        %1910 = vmatprep.subr.bf16.mxu0 %v1299
        %1911 = vmatpush1.bf16.msra.mxu0 %v1298
        %1912 = vmatprep.subr.bf16.mxu0 %v1303
        %1913 = vmatpush1.bf16.msra.mxu0 %v1302
        %1914 = vmatprep.subr.bf16.mxu0 %v1307
        %1915 = vmatpush1.bf16.msra.mxu0 %v1306
        %1916 = vmatprep.subr.bf16.mxu0 %v1311
        %1917 = vmatpush1.bf16.msra.mxu0 %v1310
        %1918 = vmatprep.subr.bf16.mxu0 %v1315
        %1919 = vmatpush1.bf16.msra.mxu0 %v1314
        %1920 = vmatprep.subr.bf16.mxu0 %v1319
        %1921 = vmatpush1.bf16.msra.mxu0 %v1318
        %1922 = vmatprep.subr.bf16.mxu0 %v1323
        %1923 = vmatpush1.bf16.msra.mxu0 %v1322
        %1924 = vmatprep.subr.bf16.mxu0 %v1327
        %1925 = vmatpush1.bf16.msra.mxu0 %v1326
        %1926 = vmatprep.subr.bf16.mxu0 %v1331
        %1927 = vmatpush1.bf16.msra.mxu0 %v1330
        %1928 = vmatprep.subr.bf16.mxu0 %v1335
        %1929 = vmatpush1.bf16.msra.mxu0 %v1334
        %1930 = vmatprep.subr.bf16.mxu0 %v1339
        %1931 = vmatpush1.bf16.msra.mxu0 %v1338
        %1932 = vmatprep.subr.bf16.mxu0 %v1343
        %1933 = vmatpush1.bf16.msra.mxu0 %v1342
        %1934 = vmatprep.subr.bf16.mxu0 %v1347
        %1935 = vmatpush1.bf16.msra.mxu0 %v1346
        %1936 = vmatprep.mubr.bf16.mxu0 %v360
        %1937 = vmatmul.mubr.bf16.gmra.mrb[0].mxu0 %v359
        %v1938 = vpop.f32.mrb[0].mxu0
        %v1939 = vadd.f32 %v603, %v1938
        %v1940 = vpop.f32.mrb[0].mxu0
        %v1941 = vadd.f32 %v607, %v1940
        %v1942 = vpop.f32.mrb[0].mxu0
        %v1943 = vadd.f32 %v603, %v1942
        %v1944 = vpop.f32.mrb[0].mxu0
        %v1945 = vadd.f32 %v607, %v1944
        %1946 = vdwg.mxu0
        %1947 = vmatprep.subr.bf16.mxu0 %v1351
        %1948 = vmatpush1.bf16.msra.mxu0 %v1350
        %1949 = vmatprep.subr.bf16.mxu0 %v1355
        %1950 = vmatpush1.bf16.msra.mxu0 %v1354
        %1951 = vmatprep.subr.bf16.mxu0 %v1359
        %1952 = vmatpush1.bf16.msra.mxu0 %v1358
        %1953 = vmatprep.subr.bf16.mxu0 %v1363
        %1954 = vmatpush1.bf16.msra.mxu0 %v1362
        %1955 = vmatprep.subr.bf16.mxu0 %v1367
        %1956 = vmatpush1.bf16.msra.mxu0 %v1366
        %1957 = vmatprep.subr.bf16.mxu0 %v1371
        %1958 = vmatpush1.bf16.msra.mxu0 %v1370
        %1959 = vmatprep.subr.bf16.mxu0 %v1375
        %1960 = vmatpush1.bf16.msra.mxu0 %v1374
        %1961 = vmatprep.subr.bf16.mxu0 %v1379
        %1962 = vmatpush1.bf16.msra.mxu0 %v1378
        %1963 = vmatprep.subr.bf16.mxu0 %v1383
        %1964 = vmatpush1.bf16.msra.mxu0 %v1382
        %1965 = vmatprep.subr.bf16.mxu0 %v1387
        %1966 = vmatpush1.bf16.msra.mxu0 %v1386
        %1967 = vmatprep.subr.bf16.mxu0 %v1391
        %1968 = vmatpush1.bf16.msra.mxu0 %v1390
        %1969 = vmatprep.subr.bf16.mxu0 %v1395
        %1970 = vmatpush1.bf16.msra.mxu0 %v1394
        %1971 = vmatprep.subr.bf16.mxu0 %v1399
        %1972 = vmatpush1.bf16.msra.mxu0 %v1398
        %1973 = vmatprep.subr.bf16.mxu0 %v1403
        %1974 = vmatpush1.bf16.msra.mxu0 %v1402
        %1975 = vmatprep.subr.bf16.mxu0 %v1407
        %1976 = vmatpush1.bf16.msra.mxu0 %v1406
        %1977 = vmatprep.subr.bf16.mxu0 %v1411
        %1978 = vmatpush1.bf16.msra.mxu0 %v1410
        %1979 = vmatprep.mubr.bf16.mxu0 %v362
        %1980 = vmatmul.mubr.bf16.gmra.mrb[0].mxu0 %v361
        %v1981 = vpop.f32.mrb[0].mxu0
        %v1982 = vadd.f32 %v1939, %v1981
        %v1983 = vpop.f32.mrb[0].mxu0
        %v1984 = vadd.f32 %v1941, %v1983
        %v1985 = vpop.f32.mrb[0].mxu0
        %v1986 = vadd.f32 %v1943, %v1985
        %v1987 = vpop.f32.mrb[0].mxu0
        %v1988 = vadd.f32 %v1945, %v1987
        %1989 = vdwg.mxu0
        %1990 = vmatprep.subr.bf16.mxu0 %v1415
        %1991 = vmatpush1.bf16.msra.mxu0 %v1414
        %1992 = vmatprep.subr.bf16.mxu0 %v1419
        %1993 = vmatpush1.bf16.msra.mxu0 %v1418
        %1994 = vmatprep.subr.bf16.mxu0 %v1423
        %1995 = vmatpush1.bf16.msra.mxu0 %v1422
        %1996 = vmatprep.subr.bf16.mxu0 %v1427
        %1997 = vmatpush1.bf16.msra.mxu0 %v1426
        %1998 = vmatprep.subr.bf16.mxu0 %v1431
        %1999 = vmatpush1.bf16.msra.mxu0 %v1430
        %2000 = vmatprep.subr.bf16.mxu0 %v1435
        %2001 = vmatpush1.bf16.msra.mxu0 %v1434
        %2002 = vmatprep.subr.bf16.mxu0 %v1439
        %2003 = vmatpush1.bf16.msra.mxu0 %v1438
        %2004 = vmatprep.subr.bf16.mxu0 %v1443
        %2005 = vmatpush1.bf16.msra.mxu0 %v1442
        %2006 = vmatprep.subr.bf16.mxu0 %v1447
        %2007 = vmatpush1.bf16.msra.mxu0 %v1446
        %2008 = vmatprep.subr.bf16.mxu0 %v1451
        %2009 = vmatpush1.bf16.msra.mxu0 %v1450
        %2010 = vmatprep.subr.bf16.mxu0 %v1455
        %2011 = vmatpush1.bf16.msra.mxu0 %v1454
        %2012 = vmatprep.subr.bf16.mxu0 %v1459
        %2013 = vmatpush1.bf16.msra.mxu0 %v1458
        %2014 = vmatprep.subr.bf16.mxu0 %v1463
        %2015 = vmatpush1.bf16.msra.mxu0 %v1462
        %2016 = vmatprep.subr.bf16.mxu0 %v1467
        %2017 = vmatpush1.bf16.msra.mxu0 %v1466
        %2018 = vmatprep.subr.bf16.mxu0 %v1471
        %2019 = vmatpush1.bf16.msra.mxu0 %v1470
        %2020 = vmatprep.subr.bf16.mxu0 %v1475
        %2021 = vmatpush1.bf16.msra.mxu0 %v1474
        %2022 = vmatprep.mubr.bf16.mxu0 %v364
        %2023 = vmatmul.mubr.bf16.gmra.mrb[0].mxu0 %v363
        %v2024 = vpop.f32.mrb[0].mxu0
        %v2025 = vadd.f32 %v1982, %v2024
        %v2026 = vpop.f32.mrb[0].mxu0
        %v2027 = vadd.f32 %v1984, %v2026
        %v2028 = vpop.f32.mrb[0].mxu0
        %v2029 = vadd.f32 %v1986, %v2028
        %v2030 = vpop.f32.mrb[0].mxu0
        %v2031 = vadd.f32 %v1988, %v2030
        %2032 = vdwg.mxu0
        %2033 = vmatprep.subr.bf16.mxu0 %v1479
        %2034 = vmatpush1.bf16.msra.mxu0 %v1478
        %2035 = vmatprep.subr.bf16.mxu0 %v1483
        %2036 = vmatpush1.bf16.msra.mxu0 %v1482
        %2037 = vmatprep.subr.bf16.mxu0 %v1487
        %2038 = vmatpush1.bf16.msra.mxu0 %v1486
        %2039 = vmatprep.subr.bf16.mxu0 %v1491
        %2040 = vmatpush1.bf16.msra.mxu0 %v1490
        %2041 = vmatprep.subr.bf16.mxu0 %v1495
        %2042 = vmatpush1.bf16.msra.mxu0 %v1494
        %2043 = vmatprep.subr.bf16.mxu0 %v1499
        %2044 = vmatpush1.bf16.msra.mxu0 %v1498
        %2045 = vmatprep.subr.bf16.mxu0 %v1503
        %2046 = vmatpush1.bf16.msra.mxu0 %v1502
        %2047 = vmatprep.subr.bf16.mxu0 %v1507
        %2048 = vmatpush1.bf16.msra.mxu0 %v1506
        %2049 = vmatprep.subr.bf16.mxu0 0
        %2050 = vmatpush1.bf16.msra.mxu0 0
        %2051 = vmatprep.subr.bf16.mxu0 0
        %2052 = vmatpush1.bf16.msra.mxu0 0
        %2053 = vmatprep.subr.bf16.mxu0 0
        %2054 = vmatpush1.bf16.msra.mxu0 0
        %2055 = vmatprep.subr.bf16.mxu0 0
        %2056 = vmatpush1.bf16.msra.mxu0 0
        %2057 = vmatprep.subr.bf16.mxu0 0
        %2058 = vmatpush1.bf16.msra.mxu0 0
        %2059 = vmatprep.subr.bf16.mxu0 0
        %2060 = vmatpush1.bf16.msra.mxu0 0
        %2061 = vmatprep.subr.bf16.mxu0 0
        %2062 = vmatpush1.bf16.msra.mxu0 0
        %2063 = vmatprep.subr.bf16.mxu0 0
        %2064 = vmatpush1.bf16.msra.mxu0 0
        %2065 = vmatprep.mubr.bf16.mxu0 0
        %2066 = vmatmul.mubr.bf16.gmra.mrb[0].mxu0 %v365
        %v2067 = vpop.f32.mrb[0].mxu0
        %v2068 = vadd.f32 %v2025, %v2067
        %v2069 = vpop.f32.mrb[0].mxu0
        %v2070 = vadd.f32 %v2027, %v2069
        %v2071 = vpop.f32.mrb[0].mxu0
        %v2072 = vadd.f32 %v2029, %v2071
        %v2073 = vpop.f32.mrb[0].mxu0
        %v2074 = vadd.f32 %v2031, %v2073
        %2075 = vdwg.mxu0
        %v2076 = vmax.f32 %v1896, 0.0
        %v2077 = vmax.f32 %v1898, 0.0
        %v2078 = vmax.f32 %v2068, 0.0
        %v2079 = vmax.f32 %v2070, 0.0
        %v2080 = vmax.f32 %v1900, 0.0
        %v2081 = vmax.f32 %v1902, 0.0
        %v2082 = vmax.f32 %v2072, 0.0
        %v2083 = vmax.f32 %v2074, 0.0
        %v2084 = vpack.c.bf16 %v2080, %v2076
        %v2085 = vpack.c.bf16 %v2081, %v2077
        %v2086 = vpack.c.bf16 %v2082, %v2078
        %v2087 = vpack.c.bf16 %v2083, %v2079
        %v2088 = vld [vmem:[#allocation7] sm:$0xff]
        %v2089 = vld [vmem:[#allocation7 + $0x8] sm:$0xff]
        %v2090 = vld [vmem:[#allocation7 + $0x10] sm:$0xff]
        %v2091 = vld [vmem:[#allocation7 + $0x18] sm:$0xff]
        %v2092 = vld [vmem:[#allocation7 + $0x20] sm:$0xff]
        %v2093 = vld [vmem:[#allocation7 + $0x28] sm:$0xff]
        %v2094 = vld [vmem:[#allocation7 + $0x30] sm:$0xff]
        %v2095 = vld [vmem:[#allocation7 + $0x38] sm:$0xff]
        %v2096 = vld [vmem:[#allocation7 + $0x40] sm:$0xff]
        %v2097 = vld [vmem:[#allocation7 + $0x48] sm:$0xff]
        %v2098 = vld [vmem:[#allocation7 + $0x50] sm:$0xff]
        %v2099 = vld [vmem:[#allocation7 + $0x58] sm:$0xff]
        %v2100 = vld [vmem:[#allocation7 + $0x60] sm:$0xff]
        %v2101 = vld [vmem:[#allocation7 + $0x68] sm:$0xff]
        %v2102 = vld [vmem:[#allocation7 + $0x70] sm:$0xff]
        %v2103 = vld [vmem:[#allocation7 + $0x78] sm:$0xff]
        %v2104 = vld [vmem:[#allocation7 + $0x80] sm:$0xff]
        %v2105 = vld [vmem:[#allocation7 + $0x88] sm:$0xff]
        %v2106 = vld [vmem:[#allocation7 + $0x90] sm:$0xff]
        %v2107 = vld [vmem:[#allocation7 + $0x98] sm:$0xff]
        %v2108 = vld [vmem:[#allocation7 + $0xa0] sm:$0xff]
        %v2109 = vld [vmem:[#allocation7 + $0xa8] sm:$0xff]
        %v2110 = vld [vmem:[#allocation7 + $0xb0] sm:$0xff]
        %v2111 = vld [vmem:[#allocation7 + $0xb8] sm:$0xff]
        %v2112 = vld [vmem:[#allocation7 + $0xc0] sm:$0xff]
        %v2113 = vld [vmem:[#allocation7 + $0xc8] sm:$0xff]
        %v2114 = vld [vmem:[#allocation7 + $0xd0] sm:$0xff]
        %v2115 = vld [vmem:[#allocation7 + $0xd8] sm:$0xff]
        %v2116 = vld [vmem:[#allocation7 + $0xe0] sm:$0xff]
        %v2117 = vld [vmem:[#allocation7 + $0xe8] sm:$0xff]
        %v2118 = vld [vmem:[#allocation7 + $0xf0] sm:$0xff]
        %v2119 = vld [vmem:[#allocation7 + $0xf8] sm:$0xff]
        %v2120 = vld [vmem:[#allocation7 + $0x100] sm:$0xff]
        %v2121 = vld [vmem:[#allocation7 + $0x108] sm:$0xff]
        %v2122 = vld [vmem:[#allocation7 + $0x110] sm:$0xff]
        %v2123 = vld [vmem:[#allocation7 + $0x118] sm:$0xff]
        %v2124 = vld [vmem:[#allocation7 + $0x120] sm:$0xff]
        %v2125 = vld [vmem:[#allocation7 + $0x128] sm:$0xff]
        %v2126 = vld [vmem:[#allocation7 + $0x130] sm:$0xff]
        %v2127 = vld [vmem:[#allocation7 + $0x138] sm:$0xff]
        %v2128 = vld [vmem:[#allocation7 + $0x140] sm:$0xff]
        %v2129 = vld [vmem:[#allocation7 + $0x148] sm:$0xff]
        %v2130 = vld [vmem:[#allocation7 + $0x150] sm:$0xff]
        %v2131 = vld [vmem:[#allocation7 + $0x158] sm:$0xff]
        %v2132 = vld [vmem:[#allocation7 + $0x160] sm:$0xff]
        %v2133 = vld [vmem:[#allocation7 + $0x168] sm:$0xff]
        %v2134 = vld [vmem:[#allocation7 + $0x170] sm:$0xff]
        %v2135 = vld [vmem:[#allocation7 + $0x178] sm:$0xff]
        %v2136 = vld [vmem:[#allocation7 + $0x180] sm:$0xff]
        %v2137 = vld [vmem:[#allocation7 + $0x188] sm:$0xff]
        %v2138 = vld [vmem:[#allocation7 + $0x190] sm:$0xff]
        %v2139 = vld [vmem:[#allocation7 + $0x198] sm:$0xff]
        %v2140 = vld [vmem:[#allocation7 + $0x1a0] sm:$0xff]
        %v2141 = vld [vmem:[#allocation7 + $0x1a8] sm:$0xff]
        %v2142 = vld [vmem:[#allocation7 + $0x1b0] sm:$0xff]
        %v2143 = vld [vmem:[#allocation7 + $0x1b8] sm:$0xff]
        %v2144 = vld [vmem:[#allocation7 + $0x1c0] sm:$0xff]
        %v2145 = vld [vmem:[#allocation7 + $0x1c8] sm:$0xff]
        %v2146 = vld [vmem:[#allocation7 + $0x1d0] sm:$0xff]
        %v2147 = vld [vmem:[#allocation7 + $0x1d8] sm:$0xff]
        %v2148 = vld [vmem:[#allocation7 + $0x1e0] sm:$0xff]
        %v2149 = vld [vmem:[#allocation7 + $0x1e8] sm:$0xff]
        %v2150 = vld [vmem:[#allocation7 + $0x1f0] sm:$0xff]
        %v2151 = vld [vmem:[#allocation7 + $0x1f8] sm:$0xff]
        %v2152 = vld [vmem:[#allocation7 + $0x200] sm:$0xff]
        %v2153 = vld [vmem:[#allocation7 + $0x208] sm:$0xff]
        %v2154 = vld [vmem:[#allocation7 + $0x210] sm:$0xff]
        %v2155 = vld [vmem:[#allocation7 + $0x218] sm:$0xff]
        %v2156 = vld [vmem:[#allocation7 + $0x220] sm:$0xff]
        %v2157 = vld [vmem:[#allocation7 + $0x228] sm:$0xff]
        %v2158 = vld [vmem:[#allocation7 + $0x230] sm:$0xff]
        %v2159 = vld [vmem:[#allocation7 + $0x238] sm:$0xff]
        %v2160 = vld [vmem:[#allocation7 + $0x240] sm:$0xff]
        %v2161 = vld [vmem:[#allocation7 + $0x248] sm:$0xff]
        %v2162 = vld [vmem:[#allocation7 + $0x250] sm:$0xff]
        %v2163 = vld [vmem:[#allocation7 + $0x258] sm:$0xff]
        %v2164 = vld [vmem:[#allocation7 + $0x260] sm:$0xff]
        %v2165 = vld [vmem:[#allocation7 + $0x268] sm:$0xff]
        %v2166 = vld [vmem:[#allocation7 + $0x270] sm:$0xff]
        %v2167 = vld [vmem:[#allocation7 + $0x278] sm:$0xff]
        %v2168 = vld [vmem:[#allocation7 + $0x280] sm:$0xff]
        %v2169 = vld [vmem:[#allocation7 + $0x288] sm:$0xff]
        %v2170 = vld [vmem:[#allocation7 + $0x290] sm:$0xff]
        %v2171 = vld [vmem:[#allocation7 + $0x298] sm:$0xff]
        %v2172 = vld [vmem:[#allocation7 + $0x2a0] sm:$0xff]
        %v2173 = vld [vmem:[#allocation7 + $0x2a8] sm:$0xff]
        %v2174 = vld [vmem:[#allocation7 + $0x2b0] sm:$0xff]
        %v2175 = vld [vmem:[#allocation7 + $0x2b8] sm:$0xff]
        %v2176 = vld [vmem:[#allocation7 + $0x2c0] sm:$0xff]
        %v2177 = vld [vmem:[#allocation7 + $0x2c8] sm:$0xff]
        %v2178 = vld [vmem:[#allocation7 + $0x2d0] sm:$0xff]
        %v2179 = vld [vmem:[#allocation7 + $0x2d8] sm:$0xff]
        %v2180 = vld [vmem:[#allocation7 + $0x2e0] sm:$0xff]
        %v2181 = vld [vmem:[#allocation7 + $0x2e8] sm:$0xff]
        %v2182 = vld [vmem:[#allocation7 + $0x2f0] sm:$0xff]
        %v2183 = vld [vmem:[#allocation7 + $0x2f8] sm:$0xff]
        %v2184 = vld [vmem:[#allocation7 + $0x300] sm:$0xff]
        %v2185 = vld [vmem:[#allocation7 + $0x308] sm:$0xff]
        %v2186 = vld [vmem:[#allocation7 + $0x310] sm:$0xff]
        %v2187 = vld [vmem:[#allocation7 + $0x318] sm:$0xff]
        %v2188 = vld [vmem:[#allocation7 + $0x320] sm:$0xff]
        %v2189 = vld [vmem:[#allocation7 + $0x328] sm:$0xff]
        %v2190 = vld [vmem:[#allocation7 + $0x330] sm:$0xff]
        %v2191 = vld [vmem:[#allocation7 + $0x338] sm:$0xff]
        %v2192 = vld [vmem:[#allocation7 + $0x340] sm:$0xff]
        %v2193 = vld [vmem:[#allocation7 + $0x348] sm:$0xff]
        %v2194 = vld [vmem:[#allocation7 + $0x350] sm:$0xff]
        %v2195 = vld [vmem:[#allocation7 + $0x358] sm:$0xff]
        %v2196 = vld [vmem:[#allocation7 + $0x360] sm:$0xff]
        %v2197 = vld [vmem:[#allocation7 + $0x368] sm:$0xff]
        %v2198 = vld [vmem:[#allocation7 + $0x370] sm:$0xff]
        %v2199 = vld [vmem:[#allocation7 + $0x378] sm:$0xff]
        %v2200 = vld [vmem:[#allocation7 + $0x380] sm:$0xff]
        %v2201 = vld [vmem:[#allocation7 + $0x388] sm:$0xff]
        %v2202 = vld [vmem:[#allocation7 + $0x390] sm:$0xff]
        %v2203 = vld [vmem:[#allocation7 + $0x398] sm:$0xff]
        %v2204 = vld [vmem:[#allocation7 + $0x3a0] sm:$0xff]
        %v2205 = vld [vmem:[#allocation7 + $0x3a8] sm:$0xff]
        %v2206 = vld [vmem:[#allocation7 + $0x3b0] sm:$0xff]
        %v2207 = vld [vmem:[#allocation7 + $0x3b8] sm:$0xff]
        %v2208 = vld [vmem:[#allocation7 + $0x3c0] sm:$0xff]
        %v2209 = vld [vmem:[#allocation7 + $0x3c8] sm:$0xff]
        %v2210 = vld [vmem:[#allocation7 + $0x3d0] sm:$0xff]
        %v2211 = vld [vmem:[#allocation7 + $0x3d8] sm:$0xff]
        %v2212 = vld [vmem:[#allocation7 + $0x3e0] sm:$0xff]
        %v2213 = vld [vmem:[#allocation7 + $0x3e8] sm:$0xff]
        %v2214 = vld [vmem:[#allocation7 + $0x3f0] sm:$0xff]
        %v2215 = vld [vmem:[#allocation7 + $0x3f8] sm:$0xff]
        %v2216 = vld [vmem:[%s4] sm:$0xf]
        %v2218 = vlaneseq
        %v2219 = vshrl.u32 %v2218, 7
        %v2220 = vsub.s32 0, %v2219
        %v2221 = vrot.slane %v2216, %v2220
        %v2222 = vlaneseq
        %v2223 = vshrl.u32 %v2222, 7
        %v2224 = vsub.s32 1, %v2223
        %v2225 = vrot.slane %v2216, %v2224
        %v2226 = vlaneseq
        %v2227 = vshrl.u32 %v2226, 7
        %v2228 = vsub.s32 2, %v2227
        %v2229 = vrot.slane %v2216, %v2228
        %v2230 = vlaneseq
        %v2231 = vshrl.u32 %v2230, 7
        %v2232 = vsub.s32 3, %v2231
        %v2233 = vrot.slane %v2216, %v2232
        %v2366 = vunpack.c.l.b16 %v2088
        %v2367 = vunpack.c.h.b16 %v2088
        %v2368 = vunpack.c.l.b16 %v2089
        %v2369 = vunpack.c.h.b16 %v2089
        %v2370 = vunpack.c.l.b16 %v2090
        %v2371 = vunpack.c.h.b16 %v2090
        %v2372 = vunpack.c.l.b16 %v2091
        %v2373 = vunpack.c.h.b16 %v2091
        %v2374 = vunpack.c.l.b16 %v2092
        %v2375 = vunpack.c.h.b16 %v2092
        %v2376 = vunpack.c.l.b16 %v2093
        %v2377 = vunpack.c.h.b16 %v2093
        %v2378 = vunpack.c.l.b16 %v2094
        %v2379 = vunpack.c.h.b16 %v2094
        %v2380 = vunpack.c.l.b16 %v2095
        %v2381 = vunpack.c.h.b16 %v2095
        %v2382 = vunpack.c.l.b16 %v2096
        %v2383 = vunpack.c.h.b16 %v2096
        %v2384 = vunpack.c.l.b16 %v2097
        %v2385 = vunpack.c.h.b16 %v2097
        %v2386 = vunpack.c.l.b16 %v2098
        %v2387 = vunpack.c.h.b16 %v2098
        %v2388 = vunpack.c.l.b16 %v2099
        %v2389 = vunpack.c.h.b16 %v2099
        %v2390 = vunpack.c.l.b16 %v2100
        %v2391 = vunpack.c.h.b16 %v2100
        %v2392 = vunpack.c.l.b16 %v2101
        %v2393 = vunpack.c.h.b16 %v2101
        %v2394 = vunpack.c.l.b16 %v2102
        %v2395 = vunpack.c.h.b16 %v2102
        %v2396 = vunpack.c.l.b16 %v2103
        %v2397 = vunpack.c.h.b16 %v2103
        %v2398 = vunpack.c.l.b16 %v2104
        %v2399 = vunpack.c.h.b16 %v2104
        %v2400 = vunpack.c.l.b16 %v2105
        %v2401 = vunpack.c.h.b16 %v2105
        %v2402 = vunpack.c.l.b16 %v2106
        %v2403 = vunpack.c.h.b16 %v2106
        %v2404 = vunpack.c.l.b16 %v2107
        %v2405 = vunpack.c.h.b16 %v2107
        %v2406 = vunpack.c.l.b16 %v2108
        %v2407 = vunpack.c.h.b16 %v2108
        %v2408 = vunpack.c.l.b16 %v2109
        %v2409 = vunpack.c.h.b16 %v2109
        %v2410 = vunpack.c.l.b16 %v2110
        %v2411 = vunpack.c.h.b16 %v2110
        %v2412 = vunpack.c.l.b16 %v2111
        %v2413 = vunpack.c.h.b16 %v2111
        %v2414 = vunpack.c.l.b16 %v2112
        %v2415 = vunpack.c.h.b16 %v2112
        %v2416 = vunpack.c.l.b16 %v2113
        %v2417 = vunpack.c.h.b16 %v2113
        %v2418 = vunpack.c.l.b16 %v2114
        %v2419 = vunpack.c.h.b16 %v2114
        %v2420 = vunpack.c.l.b16 %v2115
        %v2421 = vunpack.c.h.b16 %v2115
        %v2422 = vunpack.c.l.b16 %v2116
        %v2423 = vunpack.c.h.b16 %v2116
        %v2424 = vunpack.c.l.b16 %v2117
        %v2425 = vunpack.c.h.b16 %v2117
        %v2426 = vunpack.c.l.b16 %v2118
        %v2427 = vunpack.c.h.b16 %v2118
        %v2428 = vunpack.c.l.b16 %v2119
        %v2429 = vunpack.c.h.b16 %v2119
        %v2430 = vunpack.c.l.b16 %v2120
        %v2431 = vunpack.c.h.b16 %v2120
        %v2432 = vunpack.c.l.b16 %v2121
        %v2433 = vunpack.c.h.b16 %v2121
        %v2434 = vunpack.c.l.b16 %v2122
        %v2435 = vunpack.c.h.b16 %v2122
        %v2436 = vunpack.c.l.b16 %v2123
        %v2437 = vunpack.c.h.b16 %v2123
        %v2438 = vunpack.c.l.b16 %v2124
        %v2439 = vunpack.c.h.b16 %v2124
        %v2440 = vunpack.c.l.b16 %v2125
        %v2441 = vunpack.c.h.b16 %v2125
        %v2442 = vunpack.c.l.b16 %v2126
        %v2443 = vunpack.c.h.b16 %v2126
        %v2444 = vunpack.c.l.b16 %v2127
        %v2445 = vunpack.c.h.b16 %v2127
        %v2446 = vunpack.c.l.b16 %v2128
        %v2447 = vunpack.c.h.b16 %v2128
        %v2448 = vunpack.c.l.b16 %v2129
        %v2449 = vunpack.c.h.b16 %v2129
        %v2450 = vunpack.c.l.b16 %v2130
        %v2451 = vunpack.c.h.b16 %v2130
        %v2452 = vunpack.c.l.b16 %v2131
        %v2453 = vunpack.c.h.b16 %v2131
        %v2454 = vunpack.c.l.b16 %v2132
        %v2455 = vunpack.c.h.b16 %v2132
        %v2456 = vunpack.c.l.b16 %v2133
        %v2457 = vunpack.c.h.b16 %v2133
        %v2458 = vunpack.c.l.b16 %v2134
        %v2459 = vunpack.c.h.b16 %v2134
        %v2460 = vunpack.c.l.b16 %v2135
        %v2461 = vunpack.c.h.b16 %v2135
        %v2462 = vunpack.c.l.b16 %v2136
        %v2463 = vunpack.c.h.b16 %v2136
        %v2464 = vunpack.c.l.b16 %v2137
        %v2465 = vunpack.c.h.b16 %v2137
        %v2466 = vunpack.c.l.b16 %v2138
        %v2467 = vunpack.c.h.b16 %v2138
        %v2468 = vunpack.c.l.b16 %v2139
        %v2469 = vunpack.c.h.b16 %v2139
        %v2470 = vunpack.c.l.b16 %v2140
        %v2471 = vunpack.c.h.b16 %v2140
        %v2472 = vunpack.c.l.b16 %v2141
        %v2473 = vunpack.c.h.b16 %v2141
        %v2474 = vunpack.c.l.b16 %v2142
        %v2475 = vunpack.c.h.b16 %v2142
        %v2476 = vunpack.c.l.b16 %v2143
        %v2477 = vunpack.c.h.b16 %v2143
        %v2478 = vunpack.c.l.b16 %v2144
        %v2479 = vunpack.c.h.b16 %v2144
        %v2480 = vunpack.c.l.b16 %v2145
        %v2481 = vunpack.c.h.b16 %v2145
        %v2482 = vunpack.c.l.b16 %v2146
        %v2483 = vunpack.c.h.b16 %v2146
        %v2484 = vunpack.c.l.b16 %v2147
        %v2485 = vunpack.c.h.b16 %v2147
        %v2486 = vunpack.c.l.b16 %v2148
        %v2487 = vunpack.c.h.b16 %v2148
        %v2488 = vunpack.c.l.b16 %v2149
        %v2489 = vunpack.c.h.b16 %v2149
        %v2490 = vunpack.c.l.b16 %v2150
        %v2491 = vunpack.c.h.b16 %v2150
        %v2492 = vunpack.c.l.b16 %v2151
        %v2493 = vunpack.c.h.b16 %v2151
        %v2494 = vunpack.c.l.b16 %v2152
        %v2495 = vunpack.c.h.b16 %v2152
        %v2496 = vunpack.c.l.b16 %v2153
        %v2497 = vunpack.c.h.b16 %v2153
        %v2498 = vunpack.c.l.b16 %v2154
        %v2499 = vunpack.c.h.b16 %v2154
        %v2500 = vunpack.c.l.b16 %v2155
        %v2501 = vunpack.c.h.b16 %v2155
        %v2502 = vunpack.c.l.b16 %v2156
        %v2503 = vunpack.c.h.b16 %v2156
        %v2504 = vunpack.c.l.b16 %v2157
        %v2505 = vunpack.c.h.b16 %v2157
        %v2506 = vunpack.c.l.b16 %v2158
        %v2507 = vunpack.c.h.b16 %v2158
        %v2508 = vunpack.c.l.b16 %v2159
        %v2509 = vunpack.c.h.b16 %v2159
        %v2510 = vunpack.c.l.b16 %v2160
        %v2511 = vunpack.c.h.b16 %v2160
        %v2512 = vunpack.c.l.b16 %v2161
        %v2513 = vunpack.c.h.b16 %v2161
        %v2514 = vunpack.c.l.b16 %v2162
        %v2515 = vunpack.c.h.b16 %v2162
        %v2516 = vunpack.c.l.b16 %v2163
        %v2517 = vunpack.c.h.b16 %v2163
        %v2518 = vunpack.c.l.b16 %v2164
        %v2519 = vunpack.c.h.b16 %v2164
        %v2520 = vunpack.c.l.b16 %v2165
        %v2521 = vunpack.c.h.b16 %v2165
        %v2522 = vunpack.c.l.b16 %v2166
        %v2523 = vunpack.c.h.b16 %v2166
        %v2524 = vunpack.c.l.b16 %v2167
        %v2525 = vunpack.c.h.b16 %v2167
        %v2526 = vunpack.c.l.b16 %v2168
        %v2527 = vunpack.c.h.b16 %v2168
        %v2528 = vunpack.c.l.b16 %v2169
        %v2529 = vunpack.c.h.b16 %v2169
        %v2530 = vunpack.c.l.b16 %v2170
        %v2531 = vunpack.c.h.b16 %v2170
        %v2532 = vunpack.c.l.b16 %v2171
        %v2533 = vunpack.c.h.b16 %v2171
        %v2534 = vunpack.c.l.b16 %v2172
        %v2535 = vunpack.c.h.b16 %v2172
        %v2536 = vunpack.c.l.b16 %v2173
        %v2537 = vunpack.c.h.b16 %v2173
        %v2538 = vunpack.c.l.b16 %v2174
        %v2539 = vunpack.c.h.b16 %v2174
        %v2540 = vunpack.c.l.b16 %v2175
        %v2541 = vunpack.c.h.b16 %v2175
        %v2542 = vunpack.c.l.b16 %v2176
        %v2543 = vunpack.c.h.b16 %v2176
        %v2544 = vunpack.c.l.b16 %v2177
        %v2545 = vunpack.c.h.b16 %v2177
        %v2546 = vunpack.c.l.b16 %v2178
        %v2547 = vunpack.c.h.b16 %v2178
        %v2548 = vunpack.c.l.b16 %v2179
        %v2549 = vunpack.c.h.b16 %v2179
        %v2550 = vunpack.c.l.b16 %v2180
        %v2551 = vunpack.c.h.b16 %v2180
        %v2552 = vunpack.c.l.b16 %v2181
        %v2553 = vunpack.c.h.b16 %v2181
        %v2554 = vunpack.c.l.b16 %v2182
        %v2555 = vunpack.c.h.b16 %v2182
        %v2556 = vunpack.c.l.b16 %v2183
        %v2557 = vunpack.c.h.b16 %v2183
        %v2558 = vunpack.c.l.b16 %v2184
        %v2559 = vunpack.c.h.b16 %v2184
        %v2560 = vunpack.c.l.b16 %v2185
        %v2561 = vunpack.c.h.b16 %v2185
        %v2562 = vunpack.c.l.b16 %v2186
        %v2563 = vunpack.c.h.b16 %v2186
        %v2564 = vunpack.c.l.b16 %v2187
        %v2565 = vunpack.c.h.b16 %v2187
        %v2566 = vunpack.c.l.b16 %v2188
        %v2567 = vunpack.c.h.b16 %v2188
        %v2568 = vunpack.c.l.b16 %v2189
        %v2569 = vunpack.c.h.b16 %v2189
        %v2570 = vunpack.c.l.b16 %v2190
        %v2571 = vunpack.c.h.b16 %v2190
        %v2572 = vunpack.c.l.b16 %v2191
        %v2573 = vunpack.c.h.b16 %v2191
        %v2574 = vunpack.c.l.b16 %v2192
        %v2575 = vunpack.c.h.b16 %v2192
        %v2576 = vunpack.c.l.b16 %v2193
        %v2577 = vunpack.c.h.b16 %v2193
        %v2578 = vunpack.c.l.b16 %v2194
        %v2579 = vunpack.c.h.b16 %v2194
        %v2580 = vunpack.c.l.b16 %v2195
        %v2581 = vunpack.c.h.b16 %v2195
        %v2582 = vunpack.c.l.b16 %v2196
        %v2583 = vunpack.c.h.b16 %v2196
        %v2584 = vunpack.c.l.b16 %v2197
        %v2585 = vunpack.c.h.b16 %v2197
        %v2586 = vunpack.c.l.b16 %v2198
        %v2587 = vunpack.c.h.b16 %v2198
        %v2588 = vunpack.c.l.b16 %v2199
        %v2589 = vunpack.c.h.b16 %v2199
        %v2590 = vunpack.c.l.b16 %v2200
        %v2591 = vunpack.c.h.b16 %v2200
        %v2592 = vunpack.c.l.b16 %v2201
        %v2593 = vunpack.c.h.b16 %v2201
        %v2594 = vunpack.c.l.b16 %v2202
        %v2595 = vunpack.c.h.b16 %v2202
        %v2596 = vunpack.c.l.b16 %v2203
        %v2597 = vunpack.c.h.b16 %v2203
        %v2598 = vunpack.c.l.b16 %v2204
        %v2599 = vunpack.c.h.b16 %v2204
        %v2600 = vunpack.c.l.b16 %v2205
        %v2601 = vunpack.c.h.b16 %v2205
        %v2602 = vunpack.c.l.b16 %v2206
        %v2603 = vunpack.c.h.b16 %v2206
        %v2604 = vunpack.c.l.b16 %v2207
        %v2605 = vunpack.c.h.b16 %v2207
        %v2606 = vunpack.c.l.b16 %v2208
        %v2607 = vunpack.c.h.b16 %v2208
        %v2608 = vunpack.c.l.b16 %v2209
        %v2609 = vunpack.c.h.b16 %v2209
        %v2610 = vunpack.c.l.b16 %v2210
        %v2611 = vunpack.c.h.b16 %v2210
        %v2612 = vunpack.c.l.b16 %v2211
        %v2613 = vunpack.c.h.b16 %v2211
        %v2614 = vunpack.c.l.b16 %v2212
        %v2615 = vunpack.c.h.b16 %v2212
        %v2616 = vunpack.c.l.b16 %v2213
        %v2617 = vunpack.c.h.b16 %v2213
        %v2618 = vunpack.c.l.b16 %v2214
        %v2619 = vunpack.c.h.b16 %v2214
        %v2620 = vunpack.c.l.b16 %v2215
        %v2621 = vunpack.c.h.b16 %v2215
        %v2622 = vpack.c.b16 %v2370, %v2366
        %v2623 = vpack.c.b16 %v2371, %v2367
        %v2624 = vpack.c.b16 %v2372, %v2368
        %v2625 = vpack.c.b16 %v2373, %v2369
        %v2626 = vpack.c.b16 %v2378, %v2374
        %v2627 = vpack.c.b16 %v2379, %v2375
        %v2628 = vpack.c.b16 %v2380, %v2376
        %v2629 = vpack.c.b16 %v2381, %v2377
        %v2630 = vpack.c.b16 %v2386, %v2382
        %v2631 = vpack.c.b16 %v2387, %v2383
        %v2632 = vpack.c.b16 %v2388, %v2384
        %v2633 = vpack.c.b16 %v2389, %v2385
        %v2634 = vpack.c.b16 %v2394, %v2390
        %v2635 = vpack.c.b16 %v2395, %v2391
        %v2636 = vpack.c.b16 %v2396, %v2392
        %v2637 = vpack.c.b16 %v2397, %v2393
        %v2638 = vpack.c.b16 %v2402, %v2398
        %v2639 = vpack.c.b16 %v2403, %v2399
        %v2640 = vpack.c.b16 %v2404, %v2400
        %v2641 = vpack.c.b16 %v2405, %v2401
        %v2642 = vpack.c.b16 %v2410, %v2406
        %v2643 = vpack.c.b16 %v2411, %v2407
        %v2644 = vpack.c.b16 %v2412, %v2408
        %v2645 = vpack.c.b16 %v2413, %v2409
        %v2646 = vpack.c.b16 %v2418, %v2414
        %v2647 = vpack.c.b16 %v2419, %v2415
        %v2648 = vpack.c.b16 %v2420, %v2416
        %v2649 = vpack.c.b16 %v2421, %v2417
        %v2650 = vpack.c.b16 %v2426, %v2422
        %v2651 = vpack.c.b16 %v2427, %v2423
        %v2652 = vpack.c.b16 %v2428, %v2424
        %v2653 = vpack.c.b16 %v2429, %v2425
        %v2654 = vpack.c.b16 %v2434, %v2430
        %v2655 = vpack.c.b16 %v2435, %v2431
        %v2656 = vpack.c.b16 %v2436, %v2432
        %v2657 = vpack.c.b16 %v2437, %v2433
        %v2658 = vpack.c.b16 %v2442, %v2438
        %v2659 = vpack.c.b16 %v2443, %v2439
        %v2660 = vpack.c.b16 %v2444, %v2440
        %v2661 = vpack.c.b16 %v2445, %v2441
        %v2662 = vpack.c.b16 %v2450, %v2446
        %v2663 = vpack.c.b16 %v2451, %v2447
        %v2664 = vpack.c.b16 %v2452, %v2448
        %v2665 = vpack.c.b16 %v2453, %v2449
        %v2666 = vpack.c.b16 %v2458, %v2454
        %v2667 = vpack.c.b16 %v2459, %v2455
        %v2668 = vpack.c.b16 %v2460, %v2456
        %v2669 = vpack.c.b16 %v2461, %v2457
        %v2670 = vpack.c.b16 %v2466, %v2462
        %v2671 = vpack.c.b16 %v2467, %v2463
        %v2672 = vpack.c.b16 %v2468, %v2464
        %v2673 = vpack.c.b16 %v2469, %v2465
        %v2674 = vpack.c.b16 %v2474, %v2470
        %v2675 = vpack.c.b16 %v2475, %v2471
        %v2676 = vpack.c.b16 %v2476, %v2472
        %v2677 = vpack.c.b16 %v2477, %v2473
        %v2678 = vpack.c.b16 %v2482, %v2478
        %v2679 = vpack.c.b16 %v2483, %v2479
        %v2680 = vpack.c.b16 %v2484, %v2480
        %v2681 = vpack.c.b16 %v2485, %v2481
        %v2682 = vpack.c.b16 %v2490, %v2486
        %v2683 = vpack.c.b16 %v2491, %v2487
        %v2684 = vpack.c.b16 %v2492, %v2488
        %v2685 = vpack.c.b16 %v2493, %v2489
        %v2686 = vpack.c.b16 %v2498, %v2494
        %v2687 = vpack.c.b16 %v2499, %v2495
        %v2688 = vpack.c.b16 %v2500, %v2496
        %v2689 = vpack.c.b16 %v2501, %v2497
        %v2690 = vpack.c.b16 %v2506, %v2502
        %v2691 = vpack.c.b16 %v2507, %v2503
        %v2692 = vpack.c.b16 %v2508, %v2504
        %v2693 = vpack.c.b16 %v2509, %v2505
        %v2694 = vpack.c.b16 %v2514, %v2510
        %v2695 = vpack.c.b16 %v2515, %v2511
        %v2696 = vpack.c.b16 %v2516, %v2512
        %v2697 = vpack.c.b16 %v2517, %v2513
        %v2698 = vpack.c.b16 %v2522, %v2518
        %v2699 = vpack.c.b16 %v2523, %v2519
        %v2700 = vpack.c.b16 %v2524, %v2520
        %v2701 = vpack.c.b16 %v2525, %v2521
        %v2702 = vpack.c.b16 %v2530, %v2526
        %v2703 = vpack.c.b16 %v2531, %v2527
        %v2704 = vpack.c.b16 %v2532, %v2528
        %v2705 = vpack.c.b16 %v2533, %v2529
        %v2706 = vpack.c.b16 %v2538, %v2534
        %v2707 = vpack.c.b16 %v2539, %v2535
        %v2708 = vpack.c.b16 %v2540, %v2536
        %v2709 = vpack.c.b16 %v2541, %v2537
        %v2710 = vpack.c.b16 %v2546, %v2542
        %v2711 = vpack.c.b16 %v2547, %v2543
        %v2712 = vpack.c.b16 %v2548, %v2544
        %v2713 = vpack.c.b16 %v2549, %v2545
        %v2714 = vpack.c.b16 %v2554, %v2550
        %v2715 = vpack.c.b16 %v2555, %v2551
        %v2716 = vpack.c.b16 %v2556, %v2552
        %v2717 = vpack.c.b16 %v2557, %v2553
        %v2718 = vpack.c.b16 %v2562, %v2558
        %v2719 = vpack.c.b16 %v2563, %v2559
        %v2720 = vpack.c.b16 %v2564, %v2560
        %v2721 = vpack.c.b16 %v2565, %v2561
        %v2722 = vpack.c.b16 %v2570, %v2566
        %v2723 = vpack.c.b16 %v2571, %v2567
        %v2724 = vpack.c.b16 %v2572, %v2568
        %v2725 = vpack.c.b16 %v2573, %v2569
        %v2726 = vpack.c.b16 %v2578, %v2574
        %v2727 = vpack.c.b16 %v2579, %v2575
        %v2728 = vpack.c.b16 %v2580, %v2576
        %v2729 = vpack.c.b16 %v2581, %v2577
        %v2730 = vpack.c.b16 %v2586, %v2582
        %v2731 = vpack.c.b16 %v2587, %v2583
        %v2732 = vpack.c.b16 %v2588, %v2584
        %v2733 = vpack.c.b16 %v2589, %v2585
        %v2734 = vpack.c.b16 %v2594, %v2590
        %v2735 = vpack.c.b16 %v2595, %v2591
        %v2736 = vpack.c.b16 %v2596, %v2592
        %v2737 = vpack.c.b16 %v2597, %v2593
        %v2738 = vpack.c.b16 %v2602, %v2598
        %v2739 = vpack.c.b16 %v2603, %v2599
        %v2740 = vpack.c.b16 %v2604, %v2600
        %v2741 = vpack.c.b16 %v2605, %v2601
        %v2742 = vpack.c.b16 %v2610, %v2606
        %v2743 = vpack.c.b16 %v2611, %v2607
        %v2744 = vpack.c.b16 %v2612, %v2608
        %v2745 = vpack.c.b16 %v2613, %v2609
        %v2746 = vpack.c.b16 %v2618, %v2614
        %v2747 = vpack.c.b16 %v2619, %v2615
        %v2748 = vpack.c.b16 %v2620, %v2616
        %v2749 = vpack.c.b16 %v2621, %v2617
        %2878 = vmatprep.subr.bf16.mxu0 %v2623
        %2879 = vmatpush1.bf16.msra.mxu0 %v2622
        %2880 = vmatprep.subr.bf16.mxu0 %v2627
        %2881 = vmatpush1.bf16.msra.mxu0 %v2626
        %2882 = vmatprep.subr.bf16.mxu0 %v2631
        %2883 = vmatpush1.bf16.msra.mxu0 %v2630
        %2884 = vmatprep.subr.bf16.mxu0 %v2635
        %2885 = vmatpush1.bf16.msra.mxu0 %v2634
        %2886 = vmatprep.subr.bf16.mxu0 %v2639
        %2887 = vmatpush1.bf16.msra.mxu0 %v2638
        %2888 = vmatprep.subr.bf16.mxu0 %v2643
        %2889 = vmatpush1.bf16.msra.mxu0 %v2642
        %2890 = vmatprep.subr.bf16.mxu0 %v2647
        %2891 = vmatpush1.bf16.msra.mxu0 %v2646
        %2892 = vmatprep.subr.bf16.mxu0 %v2651
        %2893 = vmatpush1.bf16.msra.mxu0 %v2650
        %2894 = vmatprep.subr.bf16.mxu0 %v2655
        %2895 = vmatpush1.bf16.msra.mxu0 %v2654
        %2896 = vmatprep.subr.bf16.mxu0 %v2659
        %2897 = vmatpush1.bf16.msra.mxu0 %v2658
        %2898 = vmatprep.subr.bf16.mxu0 %v2663
        %2899 = vmatpush1.bf16.msra.mxu0 %v2662
        %2900 = vmatprep.subr.bf16.mxu0 %v2667
        %2901 = vmatpush1.bf16.msra.mxu0 %v2666
        %2902 = vmatprep.subr.bf16.mxu0 %v2671
        %2903 = vmatpush1.bf16.msra.mxu0 %v2670
        %2904 = vmatprep.subr.bf16.mxu0 %v2675
        %2905 = vmatpush1.bf16.msra.mxu0 %v2674
        %2906 = vmatprep.subr.bf16.mxu0 %v2679
        %2907 = vmatpush1.bf16.msra.mxu0 %v2678
        %2908 = vmatprep.subr.bf16.mxu0 %v2683
        %2909 = vmatpush1.bf16.msra.mxu0 %v2682
        %2910 = vmatprep.mubr.bf16.mxu0 %v2085
        %2911 = vmatmul.mubr.bf16.gmra.mrb[0].mxu0 %v2084
        %v2912 = vpop.f32.mrb[0].mxu0
        %v2913 = vadd.f32 %v2221, %v2912
        %v2914 = vpop.f32.mrb[0].mxu0
        %v2915 = vadd.f32 %v2225, %v2914
        %v2916 = vpop.f32.mrb[0].mxu0
        %v2917 = vadd.f32 %v2221, %v2916
        %v2918 = vpop.f32.mrb[0].mxu0
        %v2919 = vadd.f32 %v2225, %v2918
        %2920 = vdwg.mxu0
        %2921 = vmatprep.subr.bf16.mxu0 %v2687
        %2922 = vmatpush1.bf16.msra.mxu0 %v2686
        %2923 = vmatprep.subr.bf16.mxu0 %v2691
        %2924 = vmatpush1.bf16.msra.mxu0 %v2690
        %2925 = vmatprep.subr.bf16.mxu0 %v2695
        %2926 = vmatpush1.bf16.msra.mxu0 %v2694
        %2927 = vmatprep.subr.bf16.mxu0 %v2699
        %2928 = vmatpush1.bf16.msra.mxu0 %v2698
        %2929 = vmatprep.subr.bf16.mxu0 %v2703
        %2930 = vmatpush1.bf16.msra.mxu0 %v2702
        %2931 = vmatprep.subr.bf16.mxu0 %v2707
        %2932 = vmatpush1.bf16.msra.mxu0 %v2706
        %2933 = vmatprep.subr.bf16.mxu0 %v2711
        %2934 = vmatpush1.bf16.msra.mxu0 %v2710
        %2935 = vmatprep.subr.bf16.mxu0 %v2715
        %2936 = vmatpush1.bf16.msra.mxu0 %v2714
        %2937 = vmatprep.subr.bf16.mxu0 %v2719
        %2938 = vmatpush1.bf16.msra.mxu0 %v2718
        %2939 = vmatprep.subr.bf16.mxu0 %v2723
        %2940 = vmatpush1.bf16.msra.mxu0 %v2722
        %2941 = vmatprep.subr.bf16.mxu0 %v2727
        %2942 = vmatpush1.bf16.msra.mxu0 %v2726
        %2943 = vmatprep.subr.bf16.mxu0 %v2731
        %2944 = vmatpush1.bf16.msra.mxu0 %v2730
        %2945 = vmatprep.subr.bf16.mxu0 %v2735
        %2946 = vmatpush1.bf16.msra.mxu0 %v2734
        %2947 = vmatprep.subr.bf16.mxu0 %v2739
        %2948 = vmatpush1.bf16.msra.mxu0 %v2738
        %2949 = vmatprep.subr.bf16.mxu0 %v2743
        %2950 = vmatpush1.bf16.msra.mxu0 %v2742
        %2951 = vmatprep.subr.bf16.mxu0 %v2747
        %2952 = vmatpush1.bf16.msra.mxu0 %v2746
        %2953 = vmatprep.mubr.bf16.mxu0 %v2087
        %2954 = vmatmul.mubr.bf16.gmra.mrb[0].mxu0 %v2086
        %v2955 = vpop.f32.mrb[0].mxu0
        %v2956 = vadd.f32 %v2913, %v2955
        %v2957 = vpop.f32.mrb[0].mxu0
        %v2958 = vadd.f32 %v2915, %v2957
        %v2959 = vpop.f32.mrb[0].mxu0
        %v2960 = vadd.f32 %v2917, %v2959
        %v2961 = vpop.f32.mrb[0].mxu0
        %v2962 = vadd.f32 %v2919, %v2961
        %2963 = vdwg.mxu0
        %2964 = vmatprep.subr.bf16.mxu0 %v2625
        %2965 = vmatpush1.bf16.msra.mxu0 %v2624
        %2966 = vmatprep.subr.bf16.mxu0 %v2629
        %2967 = vmatpush1.bf16.msra.mxu0 %v2628
        %2968 = vmatprep.subr.bf16.mxu0 %v2633
        %2969 = vmatpush1.bf16.msra.mxu0 %v2632
        %2970 = vmatprep.subr.bf16.mxu0 %v2637
        %2971 = vmatpush1.bf16.msra.mxu0 %v2636
        %2972 = vmatprep.subr.bf16.mxu0 %v2641
        %2973 = vmatpush1.bf16.msra.mxu0 %v2640
        %2974 = vmatprep.subr.bf16.mxu0 %v2645
        %2975 = vmatpush1.bf16.msra.mxu0 %v2644
        %2976 = vmatprep.subr.bf16.mxu0 %v2649
        %2977 = vmatpush1.bf16.msra.mxu0 %v2648
        %2978 = vmatprep.subr.bf16.mxu0 %v2653
        %2979 = vmatpush1.bf16.msra.mxu0 %v2652
        %2980 = vmatprep.subr.bf16.mxu0 %v2657
        %2981 = vmatpush1.bf16.msra.mxu0 %v2656
        %2982 = vmatprep.subr.bf16.mxu0 %v2661
        %2983 = vmatpush1.bf16.msra.mxu0 %v2660
        %2984 = vmatprep.subr.bf16.mxu0 %v2665
        %2985 = vmatpush1.bf16.msra.mxu0 %v2664
        %2986 = vmatprep.subr.bf16.mxu0 %v2669
        %2987 = vmatpush1.bf16.msra.mxu0 %v2668
        %2988 = vmatprep.subr.bf16.mxu0 %v2673
        %2989 = vmatpush1.bf16.msra.mxu0 %v2672
        %2990 = vmatprep.subr.bf16.mxu0 %v2677
        %2991 = vmatpush1.bf16.msra.mxu0 %v2676
        %2992 = vmatprep.subr.bf16.mxu0 %v2681
        %2993 = vmatpush1.bf16.msra.mxu0 %v2680
        %2994 = vmatprep.subr.bf16.mxu0 %v2685
        %2995 = vmatpush1.bf16.msra.mxu0 %v2684
        %2996 = vmatprep.mubr.bf16.mxu0 %v2085
        %2997 = vmatmul.mubr.bf16.gmra.mrb[0].mxu0 %v2084
        %v2998 = vpop.f32.mrb[0].mxu0
        %v2999 = vadd.f32 %v2229, %v2998
        %v3000 = vpop.f32.mrb[0].mxu0
        %v3001 = vadd.f32 %v2233, %v3000
        %v3002 = vpop.f32.mrb[0].mxu0
        %v3003 = vadd.f32 %v2229, %v3002
        %v3004 = vpop.f32.mrb[0].mxu0
        %v3005 = vadd.f32 %v2233, %v3004
        %3006 = vdwg.mxu0
        %3007 = vmatprep.subr.bf16.mxu0 %v2689
        %3008 = vmatpush1.bf16.msra.mxu0 %v2688
        %3009 = vmatprep.subr.bf16.mxu0 %v2693
        %3010 = vmatpush1.bf16.msra.mxu0 %v2692
        %3011 = vmatprep.subr.bf16.mxu0 %v2697
        %3012 = vmatpush1.bf16.msra.mxu0 %v2696
        %3013 = vmatprep.subr.bf16.mxu0 %v2701
        %3014 = vmatpush1.bf16.msra.mxu0 %v2700
        %3015 = vmatprep.subr.bf16.mxu0 %v2705
        %3016 = vmatpush1.bf16.msra.mxu0 %v2704
        %3017 = vmatprep.subr.bf16.mxu0 %v2709
        %3018 = vmatpush1.bf16.msra.mxu0 %v2708
        %3019 = vmatprep.subr.bf16.mxu0 %v2713
        %3020 = vmatpush1.bf16.msra.mxu0 %v2712
        %3021 = vmatprep.subr.bf16.mxu0 %v2717
        %3022 = vmatpush1.bf16.msra.mxu0 %v2716
        %3023 = vmatprep.subr.bf16.mxu0 %v2721
        %3024 = vmatpush1.bf16.msra.mxu0 %v2720
        %3025 = vmatprep.subr.bf16.mxu0 %v2725
        %3026 = vmatpush1.bf16.msra.mxu0 %v2724
        %3027 = vmatprep.subr.bf16.mxu0 %v2729
        %3028 = vmatpush1.bf16.msra.mxu0 %v2728
        %3029 = vmatprep.subr.bf16.mxu0 %v2733
        %3030 = vmatpush1.bf16.msra.mxu0 %v2732
        %3031 = vmatprep.subr.bf16.mxu0 %v2737
        %3032 = vmatpush1.bf16.msra.mxu0 %v2736
        %3033 = vmatprep.subr.bf16.mxu0 %v2741
        %3034 = vmatpush1.bf16.msra.mxu0 %v2740
        %3035 = vmatprep.subr.bf16.mxu0 %v2745
        %3036 = vmatpush1.bf16.msra.mxu0 %v2744
        %3037 = vmatprep.subr.bf16.mxu0 %v2749
        %3038 = vmatpush1.bf16.msra.mxu0 %v2748
        %3039 = vmatprep.mubr.bf16.mxu0 %v2087
        %3040 = vmatmul.mubr.bf16.gmra.mrb[0].mxu0 %v2086
        %v3041 = vpop.f32.mrb[0].mxu0
        %v3042 = vadd.f32 %v2999, %v3041
        %v3043 = vpop.f32.mrb[0].mxu0
        %v3044 = vadd.f32 %v3001, %v3043
        %v3045 = vpop.f32.mrb[0].mxu0
        %v3046 = vadd.f32 %v3003, %v3045
        %v3047 = vpop.f32.mrb[0].mxu0
        %v3048 = vadd.f32 %v3005, %v3047
        %3049 = vdwg.mxu0
        %v3050 = vmax.f32 %v2956, 0.0
        %v3051 = vmax.f32 %v2958, 0.0
        %v3052 = vmax.f32 %v3042, 0.0
        %v3053 = vmax.f32 %v3044, 0.0
        %v3054 = vmax.f32 %v2960, 0.0
        %v3055 = vmax.f32 %v2962, 0.0
        %v3056 = vmax.f32 %v3046, 0.0
        %v3057 = vmax.f32 %v3048, 0.0
        %v3058 = vpack.c.bf16 %v3054, %v3050
        %v3059 = vpack.c.bf16 %v3055, %v3051
        %v3060 = vpack.c.bf16 %v3056, %v3052
        %v3061 = vpack.c.bf16 %v3057, %v3053
        %v3062 = vld [vmem:[#allocation8] sm:$0xf]
        %v3063 = vld [vmem:[#allocation8 + $0x4] sm:$0xf]
        %v3064 = vld [vmem:[#allocation8 + $0x8] sm:$0xf]
        %v3065 = vld [vmem:[#allocation8 + $0xc] sm:$0xf]
        %v3066 = vld [vmem:[#allocation8 + $0x10] sm:$0xf]
        %v3067 = vld [vmem:[#allocation8 + $0x14] sm:$0xf]
        %v3068 = vld [vmem:[#allocation8 + $0x18] sm:$0xf]
        %v3069 = vld [vmem:[#allocation8 + $0x1c] sm:$0xf]
        %v3070 = vld [vmem:[#allocation8 + $0x20] sm:$0xf]
        %v3071 = vld [vmem:[#allocation8 + $0x24] sm:$0xf]
        %v3072 = vld [vmem:[#allocation8 + $0x28] sm:$0xf]
        %v3073 = vld [vmem:[#allocation8 + $0x2c] sm:$0xf]
        %v3074 = vld [vmem:[#allocation8 + $0x30] sm:$0xf]
        %v3075 = vld [vmem:[#allocation8 + $0x34] sm:$0xf]
        %v3076 = vld [vmem:[#allocation8 + $0x38] sm:$0xf]
        %v3077 = vld [vmem:[#allocation8 + $0x3c] sm:$0xf]
        %v3078 = vld [vmem:[#allocation8 + $0x40] sm:$0xf]
        %v3079 = vld [vmem:[#allocation8 + $0x44] sm:$0xf]
        %v3080 = vld [vmem:[#allocation8 + $0x48] sm:$0xf]
        %v3081 = vld [vmem:[#allocation8 + $0x4c] sm:$0xf]
        %v3082 = vld [vmem:[#allocation8 + $0x50] sm:$0xf]
        %v3083 = vld [vmem:[#allocation8 + $0x54] sm:$0xf]
        %v3084 = vld [vmem:[#allocation8 + $0x58] sm:$0xf]
        %v3085 = vld [vmem:[#allocation8 + $0x5c] sm:$0xf]
        %v3086 = vld [vmem:[#allocation8 + $0x60] sm:$0xf]
        %v3087 = vld [vmem:[#allocation8 + $0x64] sm:$0xf]
        %v3088 = vld [vmem:[#allocation8 + $0x68] sm:$0xf]
        %v3089 = vld [vmem:[#allocation8 + $0x6c] sm:$0xf]
        %v3090 = vld [vmem:[#allocation8 + $0x70] sm:$0xf]
        %v3091 = vld [vmem:[#allocation8 + $0x74] sm:$0xf]
        %v3092 = vld [vmem:[#allocation8 + $0x78] sm:$0xf]
        %v3093 = vld [vmem:[#allocation8 + $0x7c] sm:$0xf]
        %v3094 = vld [vmem:[#allocation8 + $0x80] sm:$0xf]
        %v3095 = vld [vmem:[#allocation8 + $0x84] sm:$0xf]
        %v3096 = vld [vmem:[#allocation8 + $0x88] sm:$0xf]
        %v3097 = vld [vmem:[#allocation8 + $0x8c] sm:$0xf]
        %v3098 = vld [vmem:[#allocation8 + $0x90] sm:$0xf]
        %v3099 = vld [vmem:[#allocation8 + $0x94] sm:$0xf]
        %v3100 = vld [vmem:[#allocation8 + $0x98] sm:$0xf]
        %v3101 = vld [vmem:[#allocation8 + $0x9c] sm:$0xf]
        %v3102 = vld [vmem:[#allocation8 + $0xa0] sm:$0xf]
        %v3103 = vld [vmem:[#allocation8 + $0xa4] sm:$0xf]
        %v3104 = vld [vmem:[#allocation8 + $0xa8] sm:$0xf]
        %v3105 = vld [vmem:[#allocation8 + $0xac] sm:$0xf]
        %v3106 = vld [vmem:[#allocation8 + $0xb0] sm:$0xf]
        %v3107 = vld [vmem:[#allocation8 + $0xb4] sm:$0xf]
        %v3108 = vld [vmem:[#allocation8 + $0xb8] sm:$0xf]
        %v3109 = vld [vmem:[#allocation8 + $0xbc] sm:$0xf]
        %v3110 = vld [vmem:[#allocation8 + $0xc0] sm:$0xf]
        %v3111 = vld [vmem:[#allocation8 + $0xc4] sm:$0xf]
        %v3112 = vld [vmem:[#allocation8 + $0xc8] sm:$0xf]
        %v3113 = vld [vmem:[#allocation8 + $0xcc] sm:$0xf]
        %v3114 = vld [vmem:[#allocation8 + $0xd0] sm:$0xf]
        %v3115 = vld [vmem:[#allocation8 + $0xd4] sm:$0xf]
        %v3116 = vld [vmem:[#allocation8 + $0xd8] sm:$0xf]
        %v3117 = vld [vmem:[#allocation8 + $0xdc] sm:$0xf]
        %v3118 = vld [vmem:[#allocation8 + $0xe0] sm:$0xf]
        %v3119 = vld [vmem:[#allocation8 + $0xe4] sm:$0xf]
        %v3120 = vld [vmem:[#allocation8 + $0xe8] sm:$0xf]
        %v3121 = vld [vmem:[#allocation8 + $0xec] sm:$0xf]
        %v3122 = vld [vmem:[#allocation8 + $0xf0] sm:$0xf]
        %v3123 = vld [vmem:[#allocation8 + $0xf4] sm:$0xf]
        %v3124 = vld [vmem:[#allocation8 + $0xf8] sm:$0xf]
        %v3125 = vld [vmem:[#allocation8 + $0xfc] sm:$0xf]
        %v3126 = vld [vmem:[%s6] sm:$0x1]
        %v3128 = vlaneseq
        %v3129 = vshrl.u32 %v3128, 7
        %v3130 = vsub.s32 0, %v3129
        %v3131 = vrot.slane %v3126, %v3130
        %v3197 = vunpack.c.l.b16 %v3062
        %v3198 = vunpack.c.l.b16 %v3063
        %v3199 = vunpack.c.l.b16 %v3064
        %v3200 = vunpack.c.l.b16 %v3065
        %v3201 = vunpack.c.l.b16 %v3066
        %v3202 = vunpack.c.l.b16 %v3067
        %v3203 = vunpack.c.l.b16 %v3068
        %v3204 = vunpack.c.l.b16 %v3069
        %v3205 = vunpack.c.l.b16 %v3070
        %v3206 = vunpack.c.l.b16 %v3071
        %v3207 = vunpack.c.l.b16 %v3072
        %v3208 = vunpack.c.l.b16 %v3073
        %v3209 = vunpack.c.l.b16 %v3074
        %v3210 = vunpack.c.l.b16 %v3075
        %v3211 = vunpack.c.l.b16 %v3076
        %v3212 = vunpack.c.l.b16 %v3077
        %v3213 = vunpack.c.l.b16 %v3078
        %v3214 = vunpack.c.l.b16 %v3079
        %v3215 = vunpack.c.l.b16 %v3080
        %v3216 = vunpack.c.l.b16 %v3081
        %v3217 = vunpack.c.l.b16 %v3082
        %v3218 = vunpack.c.l.b16 %v3083
        %v3219 = vunpack.c.l.b16 %v3084
        %v3220 = vunpack.c.l.b16 %v3085
        %v3221 = vunpack.c.l.b16 %v3086
        %v3222 = vunpack.c.l.b16 %v3087
        %v3223 = vunpack.c.l.b16 %v3088
        %v3224 = vunpack.c.l.b16 %v3089
        %v3225 = vunpack.c.l.b16 %v3090
        %v3226 = vunpack.c.l.b16 %v3091
        %v3227 = vunpack.c.l.b16 %v3092
        %v3228 = vunpack.c.l.b16 %v3093
        %v3229 = vunpack.c.l.b16 %v3094
        %v3230 = vunpack.c.l.b16 %v3095
        %v3231 = vunpack.c.l.b16 %v3096
        %v3232 = vunpack.c.l.b16 %v3097
        %v3233 = vunpack.c.l.b16 %v3098
        %v3234 = vunpack.c.l.b16 %v3099
        %v3235 = vunpack.c.l.b16 %v3100
        %v3236 = vunpack.c.l.b16 %v3101
        %v3237 = vunpack.c.l.b16 %v3102
        %v3238 = vunpack.c.l.b16 %v3103
        %v3239 = vunpack.c.l.b16 %v3104
        %v3240 = vunpack.c.l.b16 %v3105
        %v3241 = vunpack.c.l.b16 %v3106
        %v3242 = vunpack.c.l.b16 %v3107
        %v3243 = vunpack.c.l.b16 %v3108
        %v3244 = vunpack.c.l.b16 %v3109
        %v3245 = vunpack.c.l.b16 %v3110
        %v3246 = vunpack.c.l.b16 %v3111
        %v3247 = vunpack.c.l.b16 %v3112
        %v3248 = vunpack.c.l.b16 %v3113
        %v3249 = vunpack.c.l.b16 %v3114
        %v3250 = vunpack.c.l.b16 %v3115
        %v3251 = vunpack.c.l.b16 %v3116
        %v3252 = vunpack.c.l.b16 %v3117
        %v3253 = vunpack.c.l.b16 %v3118
        %v3254 = vunpack.c.l.b16 %v3119
        %v3255 = vunpack.c.l.b16 %v3120
        %v3256 = vunpack.c.l.b16 %v3121
        %v3257 = vunpack.c.l.b16 %v3122
        %v3258 = vunpack.c.l.b16 %v3123
        %v3259 = vunpack.c.l.b16 %v3124
        %v3260 = vunpack.c.l.b16 %v3125
        %v3261 = vpack.c.b16 %v3198, %v3197
        %v3262 = vpack.c.b16 %v3200, %v3199
        %v3263 = vpack.c.b16 %v3202, %v3201
        %v3264 = vpack.c.b16 %v3204, %v3203
        %v3265 = vpack.c.b16 %v3206, %v3205
        %v3266 = vpack.c.b16 %v3208, %v3207
        %v3267 = vpack.c.b16 %v3210, %v3209
        %v3268 = vpack.c.b16 %v3212, %v3211
        %v3269 = vpack.c.b16 %v3214, %v3213
        %v3270 = vpack.c.b16 %v3216, %v3215
        %v3271 = vpack.c.b16 %v3218, %v3217
        %v3272 = vpack.c.b16 %v3220, %v3219
        %v3273 = vpack.c.b16 %v3222, %v3221
        %v3274 = vpack.c.b16 %v3224, %v3223
        %v3275 = vpack.c.b16 %v3226, %v3225
        %v3276 = vpack.c.b16 %v3228, %v3227
        %v3277 = vpack.c.b16 %v3230, %v3229
        %v3278 = vpack.c.b16 %v3232, %v3231
        %v3279 = vpack.c.b16 %v3234, %v3233
        %v3280 = vpack.c.b16 %v3236, %v3235
        %v3281 = vpack.c.b16 %v3238, %v3237
        %v3282 = vpack.c.b16 %v3240, %v3239
        %v3283 = vpack.c.b16 %v3242, %v3241
        %v3284 = vpack.c.b16 %v3244, %v3243
        %v3285 = vpack.c.b16 %v3246, %v3245
        %v3286 = vpack.c.b16 %v3248, %v3247
        %v3287 = vpack.c.b16 %v3250, %v3249
        %v3288 = vpack.c.b16 %v3252, %v3251
        %v3289 = vpack.c.b16 %v3254, %v3253
        %v3290 = vpack.c.b16 %v3256, %v3255
        %v3291 = vpack.c.b16 %v3258, %v3257
        %v3292 = vpack.c.b16 %v3260, %v3259
        %3325 = vmatprep.subr.bf16.mxu0 0
        %3326 = vmatpush1.bf16.msra.mxu0 %v3261
        %3327 = vmatprep.subr.bf16.mxu0 0
        %3328 = vmatpush1.bf16.msra.mxu0 %v3262
        %3329 = vmatprep.subr.bf16.mxu0 0
        %3330 = vmatpush1.bf16.msra.mxu0 %v3263
        %3331 = vmatprep.subr.bf16.mxu0 0
        %3332 = vmatpush1.bf16.msra.mxu0 %v3264
        %3333 = vmatprep.subr.bf16.mxu0 0
        %3334 = vmatpush1.bf16.msra.mxu0 %v3265
        %3335 = vmatprep.subr.bf16.mxu0 0
        %3336 = vmatpush1.bf16.msra.mxu0 %v3266
        %3337 = vmatprep.subr.bf16.mxu0 0
        %3338 = vmatpush1.bf16.msra.mxu0 %v3267
        %3339 = vmatprep.subr.bf16.mxu0 0
        %3340 = vmatpush1.bf16.msra.mxu0 %v3268
        %3341 = vmatprep.subr.bf16.mxu0 0
        %3342 = vmatpush1.bf16.msra.mxu0 %v3269
        %3343 = vmatprep.subr.bf16.mxu0 0
        %3344 = vmatpush1.bf16.msra.mxu0 %v3270
        %3345 = vmatprep.subr.bf16.mxu0 0
        %3346 = vmatpush1.bf16.msra.mxu0 %v3271
        %3347 = vmatprep.subr.bf16.mxu0 0
        %3348 = vmatpush1.bf16.msra.mxu0 %v3272
        %3349 = vmatprep.subr.bf16.mxu0 0
        %3350 = vmatpush1.bf16.msra.mxu0 %v3273
        %3351 = vmatprep.subr.bf16.mxu0 0
        %3352 = vmatpush1.bf16.msra.mxu0 %v3274
        %3353 = vmatprep.subr.bf16.mxu0 0
        %3354 = vmatpush1.bf16.msra.mxu0 %v3275
        %3355 = vmatprep.subr.bf16.mxu0 0
        %3356 = vmatpush1.bf16.msra.mxu0 %v3276
        %3357 = vmatprep.mubr.bf16.mxu0 %v3059
        %3358 = vmatmul.mubr.bf16.gmra.mrb[0].mxu0 %v3058
        %v3359 = vpop.f32.mrb[0].mxu0
        %v3360 = vadd.f32 %v3131, %v3359
        %v3361 = vpop.f32.mrb[0].mxu0
        %v3362 = vpop.f32.mrb[0].mxu0
        %v3363 = vadd.f32 %v3131, %v3362
        %v3364 = vpop.f32.mrb[0].mxu0
        %3365 = vdwg.mxu0
        %3366 = vmatprep.subr.bf16.mxu0 0
        %3367 = vmatpush1.bf16.msra.mxu0 %v3277
        %3368 = vmatprep.subr.bf16.mxu0 0
        %3369 = vmatpush1.bf16.msra.mxu0 %v3278
        %3370 = vmatprep.subr.bf16.mxu0 0
        %3371 = vmatpush1.bf16.msra.mxu0 %v3279
        %3372 = vmatprep.subr.bf16.mxu0 0
        %3373 = vmatpush1.bf16.msra.mxu0 %v3280
        %3374 = vmatprep.subr.bf16.mxu0 0
        %3375 = vmatpush1.bf16.msra.mxu0 %v3281
        %3376 = vmatprep.subr.bf16.mxu0 0
        %3377 = vmatpush1.bf16.msra.mxu0 %v3282
        %3378 = vmatprep.subr.bf16.mxu0 0
        %3379 = vmatpush1.bf16.msra.mxu0 %v3283
        %3380 = vmatprep.subr.bf16.mxu0 0
        %3381 = vmatpush1.bf16.msra.mxu0 %v3284
        %3382 = vmatprep.subr.bf16.mxu0 0
        %3383 = vmatpush1.bf16.msra.mxu0 %v3285
        %3384 = vmatprep.subr.bf16.mxu0 0
        %3385 = vmatpush1.bf16.msra.mxu0 %v3286
        %3386 = vmatprep.subr.bf16.mxu0 0
        %3387 = vmatpush1.bf16.msra.mxu0 %v3287
        %3388 = vmatprep.subr.bf16.mxu0 0
        %3389 = vmatpush1.bf16.msra.mxu0 %v3288
        %3390 = vmatprep.subr.bf16.mxu0 0
        %3391 = vmatpush1.bf16.msra.mxu0 %v3289
        %3392 = vmatprep.subr.bf16.mxu0 0
        %3393 = vmatpush1.bf16.msra.mxu0 %v3290
        %3394 = vmatprep.subr.bf16.mxu0 0
        %3395 = vmatpush1.bf16.msra.mxu0 %v3291
        %3396 = vmatprep.subr.bf16.mxu0 0
        %3397 = vmatpush1.bf16.msra.mxu0 %v3292
        %3398 = vmatprep.mubr.bf16.mxu0 %v3061
        %3399 = vmatmul.mubr.bf16.gmra.mrb[0].mxu0 %v3060
        %v3400 = vpop.f32.mrb[0].mxu0
        %v3401 = vadd.f32 %v3360, %v3400
        %v3402 = vpop.f32.mrb[0].mxu0
        %v3403 = vpop.f32.mrb[0].mxu0
        %v3404 = vadd.f32 %v3363, %v3403
        %v3405 = vpop.f32.mrb[0].mxu0
        %3406 = vdwg.mxu0
        %3407 = vmax.xlane.f32.xlu0 %v3401
        %v3408 = vpop.xlane.xlu0 %3407
        %3409 = vmax.xlane.f32.xlu0 %v3404
        %v3410 = vpop.xlane.xlu0 %3409
        %v3411 = vsub.f32 %v3401, %v3408
        %v3412 = vsub.f32 %v3404, %v3410
        %v3413 = vmul.f32 %v3411, 1.442695
        %v3414 = vpow.pop %v3413
        %v3415 = vmul.f32 %v3412, 1.442695
        %v3416 = vpow.pop %v3415
        %3417 = vadd.xlane.f32.xlu0 %v3414
        %v3418 = vpop.xlane.xlu0 %3417
        %3419 = vadd.xlane.f32.xlu0 %v3416
        %v3420 = vpop.xlane.xlu0 %3419
        %v3421 = vrcp.pop %v3418
        %v3422 = vrcp.pop %v3420
        %v3423 = vmul.f32 %v3414, %v3421
        %v3424 = vmul.f32 %v3416, %v3422
        %3425 = vst [vmem:[%s341] sm:$0xff] %v3423
        %3426 = vst [vmem:[%s341 + $0x8] sm:$0xff] %v3424
        %s3427 = sand.u32 %s186, 1
        %s3428 = scalar_lea.sflag [#allocation4], %s3427
        %s3429 = sand.u32 %s186, 1
        %s3430 = smul.addr %s3429, 16
        %s3431 = scalar_lea.vmem [#allocation10], %s3430
        // Predicated region
        $region65: #{tpu_custom_call.1} parent=47 // pred_check
          %p3432 = pneg %p196
        $region66: #{tpu_custom_call.1} parent=47 // pred_check_branch
          %3434 = sbr.rel (%p3432) target = $region68
        $region67: #{tpu_custom_call.1} parent=47 // pred_region
          %s3435 = smul.u32 2, %s26
          %s3437 = ssub.s32 256, 256
          %3438 = vsyncadd %s3428, %s3437
          %s3439 = smul.addr %s3435, 128
          %s3440 = scalar_lea.hbm %s7, %s3439
          %s3441 = sshll.u32 %s3431, 4
          %s3442 = int_to_ptr.vmem [resolvable:$true] %s3441
          %3447 = dma.vmem_to_hbm [thread:$0]  %s3442, 256, %s3440, %s3428, 128, 128, 8
        $region68: #{tpu_custom_call.1} parent=47 // pred_fallthru
          _
      $region48: #{tpu_custom_call.1} parent=5 // pred_fallthru
        _
      %p3448 = scmp.le.s32.totalorder 2, %s21
      // Predicated region
      $region69: #{tpu_custom_call.1} parent=5 // pred_check
        %p3449 = pneg %p3448
      $region70: #{tpu_custom_call.1} parent=5 // pred_check_branch
        %3451 = sbr.rel (%p3449) target = $region72
      $region71: #{tpu_custom_call.1} parent=5 // pred_region
        %s3452 = ssub.s32 %s21, 2
        // Predicated region
        $region73: #{tpu_custom_call.1} parent=71 // pred_check
          %p3453 = pneg %p202
        $region74: #{tpu_custom_call.1} parent=71 // pred_check_branch
          %3455 = sbr.rel (%p3453) target = $region76
        $region75: #{tpu_custom_call.1} parent=71 // pred_region
          %s3456 = sand.u32 %s187, 1
          %s3457 = scalar_lea.sflag [#allocation4], %s3456
          %s3458 = sand.u32 %s187, 1
          %s3459 = smul.addr %s3458, 16
          %s3460 = scalar_lea.vmem [#allocation10], %s3459
          %3461 = dma.done %s3457, 256
        $region76: #{tpu_custom_call.1} parent=71 // pred_fallthru
          _
      $region72: #{tpu_custom_call.1} parent=5 // pred_fallthru
        _
    $region6: #{tpu_custom_call.1} parent=1 // loop_footer
      %s25 = sadd.s32 1, %s21
    $region7: #{tpu_custom_call.1} parent=1 // loop_footer_branch
      %20 = sbr.rel target = $region3
    $region8: #{tpu_custom_call.1} parent=1 // loop_exit
      _
    %3462 = vsyncpa [#allocation3], 1
    %s3463 = scalar_lea.sflag [#allocation3], 1
    %3464 = vsyncpa %s3463, 1
    %3465 = vsyncpa [#allocation6], 1
    %3466 = vsyncpa [#allocation9], 1
    %3467 = vsyncpa [#allocation4], 1
    %s3468 = scalar_lea.sflag [#allocation4], 1
    %3469 = vsyncpa %s3468, 1

</llo_original>
